<compile_context>
chip_gen: v6e
topology: v6e:2x2x1
jax: 0.10.0
libtpu: 0.0.40
codegen_flags: <defaults>
</compile_context>

<pallas_src>
import functools
import math

import jax
import jax.numpy as jnp
from jax import lax
from jax.experimental import pallas as pl
from jax.experimental.pallas import tpu as pltpu


def _scconv_kernel(x_ref, gnw_ref, gnb_ref, wg_ref, agrp_ref, sq1_ref, sq2_ref,
                   w1_ref, gwcb_ref, pwc2_ref, mask_ref, o_ref, stack_ref,
                   *, C, G, H, W, cl, gate_logit, eps, mm_dtype, fast):
    HW = H * W
    x = x_ref[...]                                   # (C, HW) f32

    # ---------------- SRU : GroupBatchnorm2d (one-pass group stats) ----------
    n = float((C // G) * HW)                         # elements per group
    rsum = jnp.sum(x, axis=1, keepdims=True)         # (C, 1)
    rsq = jnp.sum(x * x, axis=1, keepdims=True)      # (C, 1)
    stats = jnp.dot(agrp_ref[...], jnp.concatenate([rsum, rsq], axis=1),
                    preferred_element_type=jnp.float32)          # (C, 2)
    gsum = stats[:, 0:1]
    gsq = stats[:, 1:2]
    mean = gsum * (1.0 / n)
    var = jnp.maximum((gsq - gsum * mean) * (1.0 / (n - 1.0)), 0.0)  # ddof=1
    inv_std = pl.reciprocal(jnp.sqrt(var) + eps, approx=False)       # (C, 1)
    gn = (x - mean) * (inv_std * gnw_ref[...]) + gnb_ref[...]        # (C, HW)

    # ---------------- SRU : gate + cross reconstruct -------------------------
    # sigmoid(gn * w_gamma) >= t  <=>  gn * w_gamma >= logit(t): no full-width
    # transcendental, just a VPU compare + select.
    x1 = jnp.where(gn * wg_ref[...] >= gate_logit, gn, 0.0)
    x2 = gn - x1                                     # exact complement
    c2 = C // 2
    # TODO(synk): the reference `reconstruct` unpacks torch.split into THREE
    # chunks, which only executes for odd channel counts, while CRU's grouped
    # conv requires even channels; we implement the standard 2-chunk ScConv
    # cross reconstruct (the only runnable interpretation).
    up = x1[:c2] + x2[c2:]                           # (C/2, HW)
    low = x1[c2:] + x2[:c2]                          # (C/2, HW)

    # ---------------- CRU ----------------------------------------------------
    cu_pad = sq1_ref.shape[0]
    chigh = C - cl
    up_s = jnp.dot(sq1_ref[...], up.astype(mm_dtype),
                   preferred_element_type=jnp.float32)           # (cu_pad, HW)
    low_s = jnp.dot(sq2_ref[...], low.astype(mm_dtype),
                    preferred_element_type=jnp.float32)          # (cl_pad, HW)

    # Y1 = GWC(up_s) + PWC1(up_s): the 3x3 grouped conv + PWC1 done as ONE
    # fat-K matmul against a pre-built (C, 9*cu_pad) weight (PWC1 folded into
    # the center tap on the host).  Taps are shifted/masked copies of up_s
    # written into a sublane-aligned VMEM scratch; boundary masks are
    # batch-invariant and precomputed on the host.
    stack_ref[pl.ds(4 * cu_pad, cu_pad), :] = up_s.astype(mm_dtype)  # center tap
    for t in range(9):
        if t == 4:
            continue
        dy, dx = t // 3 - 1, t % 3 - 1
        shift = dy * W + dx
        m = mask_ref[pl.ds(t if t < 4 else t - 1, 1), :]             # (1, HW)
        shifted = pltpu.roll(up_s, shift=(-shift) % HW, axis=1)
        stack_ref[pl.ds(t * cu_pad, cu_pad), :] = (shifted * m).astype(mm_dtype)
    y1 = jnp.dot(w1_ref[...], stack_ref[...],
                 preferred_element_type=jnp.float32) + gwcb_ref[...]  # (C, HW)

    # Y2 = cat([PWC2(low_s), low_s]) is never materialized: its two pieces are
    # gated and written to the output directly.
    y2a = jnp.dot(pwc2_ref[...], low_s.astype(mm_dtype),
                  preferred_element_type=jnp.float32)            # (chigh, HW)

    # softmax(adaptive_avg_pool(cat([Y1, Y2]))) channel gate over 2C channels.
    p1 = jnp.mean(y1, axis=1, keepdims=True)                     # (C, 1)
    p2a = jnp.mean(y2a, axis=1, keepdims=True)                   # (chigh, 1)
    p2b = jnp.mean(low_s, axis=1, keepdims=True)[:cl]            # (cl, 1)
    pooled = jnp.concatenate([p1, p2a, p2b], axis=0)             # (2C, 1)
    e = jnp.exp(pooled - jnp.max(pooled, axis=0, keepdims=True))
    sm = e * pl.reciprocal(jnp.sum(e, axis=0, keepdims=True), approx=fast)
    sm1 = sm[:C]
    sm2a = sm[C:C + chigh]
    sm2b = sm[C + chigh:]

    # out = (Y1 * sm1) + (Y2 * sm2), written piecewise (no (2C,HW) temporary).
    # For C a multiple of 32, chigh is 8-aligned so both stores are unmasked.
    o_ref[pl.ds(0, chigh), :] = y1[:chigh] * sm1[:chigh] + y2a * sm2a
    o_ref[pl.ds(chigh, cl), :] = y1[chigh:] * sm1[chigh:] + low_s[:cl] * sm2b


def make_scconv_params(key, op_channel, *, group_num=4, alpha=0.5,
                       squeeze_radio=2, group_size=2, group_kernel_size=3):
    assert group_kernel_size == 3
    C = op_channel
    up_c = int(alpha * C)
    low_c = C - up_c
    cu = up_c // squeeze_radio
    cl = low_c // squeeze_radio
    ks = jax.random.split(key, 7)
    gn_w = jax.random.normal(ks[0], (C, 1), jnp.float32)   # torch.randn(C,1,1)
    gn_b = jnp.zeros((C, 1), jnp.float32)
    sq1 = 0.3 * jax.random.normal(ks[1], (cu, up_c), jnp.float32)
    sq2 = 0.3 * jax.random.normal(ks[2], (cl, low_c), jnp.float32)
    gwc = 0.3 * jax.random.normal(ks[3], (C, cu // group_size, 3, 3), jnp.float32)
    gwc_b = 0.1 * jax.random.normal(ks[4], (C, 1), jnp.float32)
    pwc1 = 0.3 * jax.random.normal(ks[5], (C, cu), jnp.float32)
    pwc2 = 0.3 * jax.random.normal(ks[6], (C - cl, cl), jnp.float32)
    return dict(gn_w=gn_w, gn_b=gn_b, sq1=sq1, sq2=sq2, gwc=gwc, gwc_b=gwc_b,
                pwc1=pwc1, pwc2=pwc2,
                meta=dict(group_num=group_num, up_c=up_c, group_size=group_size))


def scconv_forward(x, params, *, gate_treshold=0.5, eps=1e-10,
                   compute_dtype=jnp.bfloat16):
    N, C, H, W = x.shape
    HW = H * W
    assert HW % 128 == 0, "flattened spatial must be a multiple of 128"
    assert params["meta"]["up_c"] == C // 2, "kernel assumes alpha == 0.5"
    assert 0.0 < gate_treshold < 1.0
    G = params["meta"]["group_num"]
    group_size = params["meta"]["group_size"]
    gate_logit = float(math.log(gate_treshold / (1.0 - gate_treshold)))

    cu = params["sq1"].shape[0]
    cl = params["sq2"].shape[0]
    chigh = C - cl
    mm_dtype = compute_dtype
    fast = (mm_dtype == jnp.bfloat16)
    sub = 16 if fast else 8                       # sublane-pack alignment
    cu_pad = -(-cu // sub) * sub
    cl_pad = -(-cl // sub) * sub

    f32 = jnp.float32
    # --------- batch-invariant host-side prep (weights, masks, w_gamma) ------
    gn_w = params["gn_w"].astype(f32)
    gn_b = params["gn_b"].astype(f32)
    w_gamma = gn_w / jnp.sum(gn_w)                               # (C, 1)

    # group-membership matrix for GroupBatchnorm2d statistics
    k = C // G
    cid = jnp.arange(C)
    agrp = (cid[:, None] // k == cid[None, :] // k).astype(f32)  # (C, C)

    sq1 = jnp.pad(params["sq1"], ((0, cu_pad - cu), (0, 0))).astype(mm_dtype)
    sq2 = jnp.pad(params["sq2"], ((0, cl_pad - cl), (0, 0))).astype(mm_dtype)
    pwc2 = jnp.pad(params["pwc2"], ((0, 0), (0, cl_pad - cl))).astype(mm_dtype)
    gwc_b = params["gwc_b"].astype(f32)

    # expand the grouped-conv weight to dense block-diagonal per tap, fuse PWC1
    # into the center tap, zero-pad each K block to cu_pad -> (C, 9*cu_pad)
    in_pg = cu // group_size
    out_pg = C // group_size
    gwc_dense = jnp.zeros((3, 3, C, cu), f32)
    for g in range(group_size):
        blk = jnp.transpose(params["gwc"][g * out_pg:(g + 1) * out_pg], (2, 3, 0, 1))
        gwc_dense = gwc_dense.at[:, :, g * out_pg:(g + 1) * out_pg,
                                 g * in_pg:(g + 1) * in_pg].set(blk)
    gwc_dense = gwc_dense.reshape(9, C, cu)
    w1_blocks = []
    for t in range(9):
        blk = gwc_dense[t] + (params["pwc1"] if t == 4 else 0.0)
        w1_blocks.append(jnp.pad(blk, ((0, 0), (0, cu_pad - cu))))
    w1 = jnp.concatenate(w1_blocks, axis=1).astype(mm_dtype)     # (C, 9*cu_pad)

    # 3x3 boundary masks for the 8 off-center taps (hoisted out of the kernel)
    pos = jnp.arange(HW)
    hh, ww = pos // W, pos % W
    mrows = []
    for t in range(9):
        if t == 4:
            continue
        dy, dx = t // 3 - 1, t % 3 - 1
        mrows.append((hh + dy >= 0) & (hh + dy < H) & (ww + dx >= 0) & (ww + dx < W))
    masks = jnp.stack(mrows).astype(f32)                         # (8, HW)

    # TODO(synk): optionally keep x in bf16 at the HBM boundary (upcast in-kernel)
    # to halve DMA traffic on v5e; kept f32 here for exact GroupNorm statistics.
    x_flat = x.reshape(N, C, HW).astype(f32)

    kernel = functools.partial(_scconv_kernel, C=C, G=G, H=H, W=W, cl=cl,
                               gate_logit=gate_logit, eps=eps,
                               mm_dtype=mm_dtype, fast=fast)

    args = (x_flat, gn_w, gn_b, w_gamma, agrp, sq1, sq2, w1, gwc_b, pwc2, masks)

    def full_spec(a):
        nd = a.ndim
        return pl.BlockSpec(a.shape, lambda n, _nd=nd: (0,) * _nd)

    in_specs = [pl.BlockSpec((pl.Squeezed(), C, HW), lambda n: (n, 0, 0))] + [
        full_spec(a) for a in args[1:]]

    # Generation-aware scoped-VMEM limit: never request more than ~3/4 of the
    # physical per-core VMEM (v7x: 64 MiB -> ~48 MiB cap; v5e/v6e: 128 -> 96).
    try:
        vmem_phys = int(pltpu.get_tpu_info().vmem_capacity_bytes)
    except Exception:
        vmem_phys = 64 << 20                       # conservative fallback
    cap = (vmem_phys * 3) // 4
    # Per-step working set ~= 14 full-width (C, HW) f32-equivalent slabs
    # (in/out double-buffers, gn, x1, up/low, up_s/low_s, bf16 tap stack, y1, y2a).
    need = 14 * C * HW * 4 + (4 << 20)
    vmem_bytes = int(min(max(need, 32 << 20), cap))
    # TODO(synk): for feature maps whose working set exceeds `cap` (esp. v7x's
    # 64 MiB VMEM), add an HW-tiled two-pass structure (pass 1: GN sums per HW
    # chunk; pass 2: normalize + CRU per tile with a one-row halo for the taps).

    out = pl.pallas_call(
        kernel,
        out_shape=jax.ShapeDtypeStruct((N, C, HW), jnp.float32),
        grid=(N,),
        in_specs=in_specs,
        out_specs=pl.BlockSpec((pl.Squeezed(), C, HW), lambda n: (n, 0, 0)),
        scratch_shapes=[pltpu.VMEM((9 * cu_pad, HW), mm_dtype)],
        compiler_params=pltpu.CompilerParams(
            dimension_semantics=("parallel",),
            vmem_limit_bytes=vmem_bytes),
    )(*args)
    return out.reshape(N, C, H, W)


def scconv_reference(x, params, *, gate_treshold=0.5, eps=1e-10):
    """Pure-JAX reference (mirrors the PyTorch forward) for validation."""
    N, C, H, W = x.shape
    G = params["meta"]["group_num"]
    up_c = params["meta"]["up_c"]
    group_size = params["meta"]["group_size"]
    gn_w = params["gn_w"].reshape(1, C, 1, 1)
    gn_b = params["gn_b"].reshape(1, C, 1, 1)
    with jax.default_matmul_precision("highest"):
        xr = x.reshape(N, G, -1)
        mean = xr.mean(axis=2, keepdims=True)
        std = jnp.std(xr, axis=2, keepdims=True, ddof=1)
        xr = (xr - mean) / (std + eps)
        gn = xr.reshape(N, C, H, W) * gn_w + gn_b
        w_gamma = (params["gn_w"] / jnp.sum(params["gn_w"])).reshape(1, C, 1, 1)
        rw = jax.nn.sigmoid(gn * w_gamma)
        info = rw >= gate_treshold
        x1 = jnp.where(info, gn, 0.0)
        x2 = jnp.where(info, 0.0, gn)
        c2 = C // 2
        sru = jnp.concatenate([x1[:, :c2] + x2[:, c2:], x1[:, c2:] + x2[:, :c2]],
                              axis=1)

        up, low = sru[:, :up_c], sru[:, up_c:]
        up_s = jnp.einsum("oc,nchw->nohw", params["sq1"], up)
        low_s = jnp.einsum("oc,nchw->nohw", params["sq2"], low)
        gwc_out = lax.conv_general_dilated(
            up_s, params["gwc"], (1, 1), "SAME",
            dimension_numbers=("NCHW", "OIHW", "NCHW"),
            feature_group_count=group_size) + params["gwc_b"].reshape(1, C, 1, 1)
        y1 = gwc_out + jnp.einsum("oc,nchw->nohw", params["pwc1"], up_s)
        y2 = jnp.concatenate(
            [jnp.einsum("oc,nchw->nohw", params["pwc2"], low_s), low_s], axis=1)
        z = jnp.concatenate([y1, y2], axis=1)
        pooled = z.mean(axis=(2, 3), keepdims=True)
        sm = jax.nn.softmax(pooled, axis=1)
        zg = sm * z
        return zg[:, :C] + zg[:, C:]


if __name__ == "__main__":
    # C multiple of 32 keeps every channel split (C/2, 3C/4) 8-row aligned.
    N, C, H, W = 2, 32, 16, 16
    key = jax.random.PRNGKey(0)
    kx, kp = jax.random.split(key)
    x = jax.random.normal(kx, (N, C, H, W), jnp.float32)
    params = make_scconv_params(kp, C, group_num=4)

    ref = scconv_reference(x, params)

    # Strict f32 path: validates the forward semantics tightly.
    out32 = jax.block_until_ready(
        scconv_forward(x, params, compute_dtype=jnp.float32))
    assert out32.shape == (N, C, H, W)
    err32 = float(jnp.max(jnp.abs(out32 - ref)))
    if not jnp.allclose(out32, ref, rtol=1e-2, atol=1e-2):
        raise AssertionError(f"Pallas ScConv (f32) mismatch, max abs err={err32}")

    # Default fast path: bf16 MXU operands, approx softmax reciprocal.
    out = jax.block_until_ready(scconv_forward(x, params))
    err = float(jnp.max(jnp.abs(out - ref)))
    if not jnp.allclose(out, ref, rtol=5e-2, atol=5e-2):
        raise AssertionError(f"Pallas ScConv (bf16) mismatch, max abs err={err}")

    print("KERNEL_OK")
</pallas_src>

<mosaic_0001>
module attributes {stable_mosaic.version = 11 : i64} {
  func.func @_scconv_kernel(%arg0: i32, %arg1: memref<1x32x256xf32, #tpu.memory_space<vmem>>, %arg2: memref<32x1xf32, #tpu.memory_space<vmem>>, %arg3: memref<32x1xf32, #tpu.memory_space<vmem>>, %arg4: memref<32x1xf32, #tpu.memory_space<vmem>>, %arg5: memref<32x32xf32, #tpu.memory_space<vmem>>, %arg6: memref<8x16xf32, #tpu.memory_space<vmem>>, %arg7: memref<8x16xf32, #tpu.memory_space<vmem>>, %arg8: memref<32x72xf32, #tpu.memory_space<vmem>>, %arg9: memref<32x1xf32, #tpu.memory_space<vmem>>, %arg10: memref<24x8xf32, #tpu.memory_space<vmem>>, %arg11: memref<8x256xf32, #tpu.memory_space<vmem>>, %arg12: memref<1x32x256xf32, #tpu.memory_space<vmem>>, %arg13: memref<72x256xf32, #tpu.memory_space<vmem>>) attributes {dimension_semantics = [#tpu.dimension_semantics<parallel>], iteration_bounds = array<i64: 2>, scalar_prefetch = 0 : i64, scratch_operands = 1 : i64, tpu.core_type = #tpu.core_type<tc>, window_params = [{transform_indices = @transform_0, window_bounds = array<i64: 1, 32, 256>}, {pipeline_mode = #tpu.pipeline_mode<synchronous>, transform_indices = @transform_1, window_bounds = array<i64: 32, 1>}, {pipeline_mode = #tpu.pipeline_mode<synchronous>, transform_indices = @transform_2, window_bounds = array<i64: 32, 1>}, {pipeline_mode = #tpu.pipeline_mode<synchronous>, transform_indices = @transform_3, window_bounds = array<i64: 32, 1>}, {pipeline_mode = #tpu.pipeline_mode<synchronous>, transform_indices = @transform_4, window_bounds = array<i64: 32, 32>}, {pipeline_mode = #tpu.pipeline_mode<synchronous>, transform_indices = @transform_5, window_bounds = array<i64: 8, 16>}, {pipeline_mode = #tpu.pipeline_mode<synchronous>, transform_indices = @transform_6, window_bounds = array<i64: 8, 16>}, {pipeline_mode = #tpu.pipeline_mode<synchronous>, transform_indices = @transform_7, window_bounds = array<i64: 32, 72>}, {pipeline_mode = #tpu.pipeline_mode<synchronous>, transform_indices = @transform_8, window_bounds = array<i64: 32, 1>}, {pipeline_mode = #tpu.pipeline_mode<synchronous>, transform_indices = @transform_9, window_bounds = array<i64: 24, 8>}, {pipeline_mode = #tpu.pipeline_mode<synchronous>, transform_indices = @transform_10, window_bounds = array<i64: 8, 256>}, {transform_indices = @transform_11, window_bounds = array<i64: 1, 32, 256>}]} {
    %c0 = arith.constant 0 : index
    %c0_0 = arith.constant 0 : index
    %c0_1 = arith.constant 0 : index
    %0 = vector.load %arg1[%c0, %c0_0, %c0_1] : memref<1x32x256xf32, #tpu.memory_space<vmem>>, vector<1x32x256xf32>
    %1 = vector.shape_cast %0 : vector<1x32x256xf32> to vector<32x256xf32>
    %cst = arith.constant dense<0.000000e+00> : vector<32xf32>
    %2 = vector.multi_reduction <add>, %1, %cst [1] : vector<32x256xf32> to vector<32xf32>
    %3 = vector.shape_cast %2 : vector<32xf32> to vector<32x1xf32>
    %4 = arith.mulf %1, %1 : vector<32x256xf32>
    %cst_2 = arith.constant dense<0.000000e+00> : vector<32xf32>
    %5 = vector.multi_reduction <add>, %4, %cst_2 [1] : vector<32x256xf32> to vector<32xf32>
    %6 = vector.shape_cast %5 : vector<32xf32> to vector<32x1xf32>
    %c0_3 = arith.constant 0 : index
    %c0_4 = arith.constant 0 : index
    %7 = vector.load %arg5[%c0_3, %c0_4] : memref<32x32xf32, #tpu.memory_space<vmem>>, vector<32x32xf32>
    %8 = tpu.concatenate %3, %6 in 1 : vector<32x1xf32>, vector<32x1xf32> -> vector<32x2xf32>
    %cst_5 = arith.constant dense<0.000000e+00> : vector<32x2xf32>
    %9 = tpu.matmul %7, %8, %cst_5 {dimension_numbers = #tpu.dot_dimension_numbers<[1], [0], [0], [1], [0, 0, 1, 1], [], []>} : vector<32x32xf32>, vector<32x2xf32>, vector<32x2xf32> -> vector<32x2xf32>
    %10 = vector.extract_strided_slice %9 {offsets = [0, 0], sizes = [32, 1], strides = [1, 1]} : vector<32x2xf32> to vector<32x1xf32>
    %11 = vector.extract_strided_slice %9 {offsets = [0, 1], sizes = [32, 1], strides = [1, 1]} : vector<32x2xf32> to vector<32x1xf32>
    %cst_6 = arith.constant 4.8828125E-4 : f32
    %12 = vector.broadcast %cst_6 : f32 to vector<32x1xf32>
    %13 = arith.mulf %10, %12 : vector<32x1xf32>
    %14 = arith.mulf %10, %13 : vector<32x1xf32>
    %15 = arith.subf %11, %14 : vector<32x1xf32>
    %cst_7 = arith.constant 4.88519785E-4 : f32
    %16 = vector.broadcast %cst_7 : f32 to vector<32x1xf32>
    %17 = arith.mulf %15, %16 : vector<32x1xf32>
    %cst_8 = arith.constant 0.000000e+00 : f32
    %18 = vector.broadcast %cst_8 : f32 to vector<32x1xf32>
    %19 = arith.maximumf %17, %18 : vector<32x1xf32>
    %20 = math.sqrt %19 : vector<32x1xf32>
    %cst_9 = arith.constant 1.000000e-10 : f32
    %21 = vector.broadcast %cst_9 : f32 to vector<32x1xf32>
    %22 = arith.addf %20, %21 : vector<32x1xf32>
    %23 = tpu.reciprocal %22 : vector<32x1xf32> -> vector<32x1xf32>
    %24 = vector.broadcast %13 : vector<32x1xf32> to vector<32x256xf32>
    %25 = arith.subf %1, %24 : vector<32x256xf32>
    %c0_10 = arith.constant 0 : index
    %c0_11 = arith.constant 0 : index
    %26 = vector.load %arg2[%c0_10, %c0_11] : memref<32x1xf32, #tpu.memory_space<vmem>>, vector<32x1xf32>
    %27 = arith.mulf %23, %26 : vector<32x1xf32>
    %28 = vector.broadcast %27 : vector<32x1xf32> to vector<32x256xf32>
    %29 = arith.mulf %25, %28 : vector<32x256xf32>
    %c0_12 = arith.constant 0 : index
    %c0_13 = arith.constant 0 : index
    %30 = vector.load %arg3[%c0_12, %c0_13] : memref<32x1xf32, #tpu.memory_space<vmem>>, vector<32x1xf32>
    %31 = vector.broadcast %30 : vector<32x1xf32> to vector<32x256xf32>
    %32 = arith.addf %29, %31 : vector<32x256xf32>
    %c0_14 = arith.constant 0 : index
    %c0_15 = arith.constant 0 : index
    %33 = vector.load %arg4[%c0_14, %c0_15] : memref<32x1xf32, #tpu.memory_space<vmem>>, vector<32x1xf32>
    %34 = vector.broadcast %33 : vector<32x1xf32> to vector<32x256xf32>
    %35 = arith.mulf %32, %34 : vector<32x256xf32>
    %cst_16 = arith.constant 0.000000e+00 : f32
    %36 = vector.broadcast %cst_16 : f32 to vector<32x256xf32>
    %37 = arith.cmpf oge, %35, %36 : vector<32x256xf32>
    %cst_17 = arith.constant 0.000000e+00 : f32
    %38 = vector.broadcast %cst_17 : f32 to vector<32x256xf32>
    %39 = arith.select %37, %32, %38 : vector<32x256xi1>, vector<32x256xf32>
    %40 = arith.subf %32, %39 : vector<32x256xf32>
    %41 = vector.extract_strided_slice %39 {offsets = [0, 0], sizes = [16, 256], strides = [1, 1]} : vector<32x256xf32> to vector<16x256xf32>
    %42 = vector.extract_strided_slice %40 {offsets = [16, 0], sizes = [16, 256], strides = [1, 1]} : vector<32x256xf32> to vector<16x256xf32>
    %43 = arith.addf %41, %42 : vector<16x256xf32>
    %44 = vector.extract_strided_slice %39 {offsets = [16, 0], sizes = [16, 256], strides = [1, 1]} : vector<32x256xf32> to vector<16x256xf32>
    %45 = vector.extract_strided_slice %40 {offsets = [0, 0], sizes = [16, 256], strides = [1, 1]} : vector<32x256xf32> to vector<16x256xf32>
    %46 = arith.addf %44, %45 : vector<16x256xf32>
    %c0_18 = arith.constant 0 : index
    %c0_19 = arith.constant 0 : index
    %47 = vector.load %arg6[%c0_18, %c0_19] : memref<8x16xf32, #tpu.memory_space<vmem>>, vector<8x16xf32>
    %cst_20 = arith.constant dense<0.000000e+00> : vector<8x256xf32>
    %48 = tpu.matmul %47, %43, %cst_20 {dimension_numbers = #tpu.dot_dimension_numbers<[1], [0], [0], [1], [0, 0, 1, 1], [], []>} : vector<8x16xf32>, vector<16x256xf32>, vector<8x256xf32> -> vector<8x256xf32>
    %c0_21 = arith.constant 0 : index
    %c0_22 = arith.constant 0 : index
    %49 = vector.load %arg7[%c0_21, %c0_22] : memref<8x16xf32, #tpu.memory_space<vmem>>, vector<8x16xf32>
    %cst_23 = arith.constant dense<0.000000e+00> : vector<8x256xf32>
    %50 = tpu.matmul %49, %46, %cst_23 {dimension_numbers = #tpu.dot_dimension_numbers<[1], [0], [0], [1], [0, 0, 1, 1], [], []>} : vector<8x16xf32>, vector<16x256xf32>, vector<8x256xf32> -> vector<8x256xf32>
    %c32 = arith.constant 32 : index
    %c0_24 = arith.constant 0 : index
    %51 = vector.load %arg13[%c32, %c0_24] : memref<72x256xf32, #tpu.memory_space<vmem>>, vector<8x256xf32>
    tpu.vector_store %arg13[%c32, %c0_24], %48 {strides = array<i32>} : memref<72x256xf32, #tpu.memory_space<vmem>>, vector<8x256xf32>,
    %c0_25 = arith.constant 0 : index
    %c0_26 = arith.constant 0 : index
    %52 = vector.load %arg11[%c0_25, %c0_26] : memref<8x256xf32, #tpu.memory_space<vmem>>, vector<1x256xf32>
    %c17_i32 = arith.constant 17 : i32
    %53 = tpu.dynamic_rotate %48 by %c17_i32 dim 1 : vector<8x256xf32>, i32 -> vector<8x256xf32>
    %54 = vector.broadcast %52 : vector<1x256xf32> to vector<8x256xf32>
    %55 = arith.mulf %53, %54 : vector<8x256xf32>
    %c0_27 = arith.constant 0 : index
    %c0_28 = arith.constant 0 : index
    %56 = vector.load %arg13[%c0_27, %c0_28] : memref<72x256xf32, #tpu.memory_space<vmem>>, vector<8x256xf32>
    tpu.vector_store %arg13[%c0_27, %c0_28], %55 {strides = array<i32>} : memref<72x256xf32, #tpu.memory_space<vmem>>, vector<8x256xf32>,
    %c1 = arith.constant 1 : index
    %c0_29 = arith.constant 0 : index
    %57 = vector.load %arg11[%c1, %c0_29] : memref<8x256xf32, #tpu.memory_space<vmem>>, vector<1x256xf32>
    %c16_i32 = arith.constant 16 : i32
    %58 = tpu.dynamic_rotate %48 by %c16_i32 dim 1 : vector<8x256xf32>, i32 -> vector<8x256xf32>
    %59 = vector.broadcast %57 : vector<1x256xf32> to vector<8x256xf32>
    %60 = arith.mulf %58, %59 : vector<8x256xf32>
    %c8 = arith.constant 8 : index
    %c0_30 = arith.constant 0 : index
    %61 = vector.load %arg13[%c8, %c0_30] : memref<72x256xf32, #tpu.memory_space<vmem>>, vector<8x256xf32>
    tpu.vector_store %arg13[%c8, %c0_30], %60 {strides = array<i32>} : memref<72x256xf32, #tpu.memory_space<vmem>>, vector<8x256xf32>,
    %c2 = arith.constant 2 : index
    %c0_31 = arith.constant 0 : index
    %62 = vector.load %arg11[%c2, %c0_31] : memref<8x256xf32, #tpu.memory_space<vmem>>, vector<1x256xf32>
    %c15_i32 = arith.constant 15 : i32
    %63 = tpu.dynamic_rotate %48 by %c15_i32 dim 1 : vector<8x256xf32>, i32 -> vector<8x256xf32>
    %64 = vector.broadcast %62 : vector<1x256xf32> to vector<8x256xf32>
    %65 = arith.mulf %63, %64 : vector<8x256xf32>
    %c16 = arith.constant 16 : index
    %c0_32 = arith.constant 0 : index
    %66 = vector.load %arg13[%c16, %c0_32] : memref<72x256xf32, #tpu.memory_space<vmem>>, vector<8x256xf32>
    tpu.vector_store %arg13[%c16, %c0_32], %65 {strides = array<i32>} : memref<72x256xf32, #tpu.memory_space<vmem>>, vector<8x256xf32>,
    %c3 = arith.constant 3 : index
    %c0_33 = arith.constant 0 : index
    %67 = vector.load %arg11[%c3, %c0_33] : memref<8x256xf32, #tpu.memory_space<vmem>>, vector<1x256xf32>
    %c1_i32 = arith.constant 1 : i32
    %68 = tpu.dynamic_rotate %48 by %c1_i32 dim 1 : vector<8x256xf32>, i32 -> vector<8x256xf32>
    %69 = vector.broadcast %67 : vector<1x256xf32> to vector<8x256xf32>
    %70 = arith.mulf %68, %69 : vector<8x256xf32>
    %c24 = arith.constant 24 : index
    %c0_34 = arith.constant 0 : index
    %71 = vector.load %arg13[%c24, %c0_34] : memref<72x256xf32, #tpu.memory_space<vmem>>, vector<8x256xf32>
    tpu.vector_store %arg13[%c24, %c0_34], %70 {strides = array<i32>} : memref<72x256xf32, #tpu.memory_space<vmem>>, vector<8x256xf32>,
    %c4 = arith.constant 4 : index
    %c0_35 = arith.constant 0 : index
    %72 = vector.load %arg11[%c4, %c0_35] : memref<8x256xf32, #tpu.memory_space<vmem>>, vector<1x256xf32>
    %c255_i32 = arith.constant 255 : i32
    %73 = tpu.dynamic_rotate %48 by %c255_i32 dim 1 : vector<8x256xf32>, i32 -> vector<8x256xf32>
    %74 = vector.broadcast %72 : vector<1x256xf32> to vector<8x256xf32>
    %75 = arith.mulf %73, %74 : vector<8x256xf32>
    %c40 = arith.constant 40 : index
    %c0_36 = arith.constant 0 : index
    %76 = vector.load %arg13[%c40, %c0_36] : memref<72x256xf32, #tpu.memory_space<vmem>>, vector<8x256xf32>
    tpu.vector_store %arg13[%c40, %c0_36], %75 {strides = array<i32>} : memref<72x256xf32, #tpu.memory_space<vmem>>, vector<8x256xf32>,
    %c5 = arith.constant 5 : index
    %c0_37 = arith.constant 0 : index
    %77 = vector.load %arg11[%c5, %c0_37] : memref<8x256xf32, #tpu.memory_space<vmem>>, vector<1x256xf32>
    %c241_i32 = arith.constant 241 : i32
    %78 = tpu.dynamic_rotate %48 by %c241_i32 dim 1 : vector<8x256xf32>, i32 -> vector<8x256xf32>
    %79 = vector.broadcast %77 : vector<1x256xf32> to vector<8x256xf32>
    %80 = arith.mulf %78, %79 : vector<8x256xf32>
    %c48 = arith.constant 48 : index
    %c0_38 = arith.constant 0 : index
    %81 = vector.load %arg13[%c48, %c0_38] : memref<72x256xf32, #tpu.memory_space<vmem>>, vector<8x256xf32>
    tpu.vector_store %arg13[%c48, %c0_38], %80 {strides = array<i32>} : memref<72x256xf32, #tpu.memory_space<vmem>>, vector<8x256xf32>,
    %c6 = arith.constant 6 : index
    %c0_39 = arith.constant 0 : index
    %82 = vector.load %arg11[%c6, %c0_39] : memref<8x256xf32, #tpu.memory_space<vmem>>, vector<1x256xf32>
    %c240_i32 = arith.constant 240 : i32
    %83 = tpu.dynamic_rotate %48 by %c240_i32 dim 1 : vector<8x256xf32>, i32 -> vector<8x256xf32>
    %84 = vector.broadcast %82 : vector<1x256xf32> to vector<8x256xf32>
    %85 = arith.mulf %83, %84 : vector<8x256xf32>
    %c56 = arith.constant 56 : index
    %c0_40 = arith.constant 0 : index
    %86 = vector.load %arg13[%c56, %c0_40] : memref<72x256xf32, #tpu.memory_space<vmem>>, vector<8x256xf32>
    tpu.vector_store %arg13[%c56, %c0_40], %85 {strides = array<i32>} : memref<72x256xf32, #tpu.memory_space<vmem>>, vector<8x256xf32>,
    %c7 = arith.constant 7 : index
    %c0_41 = arith.constant 0 : index
    %87 = vector.load %arg11[%c7, %c0_41] : memref<8x256xf32, #tpu.memory_space<vmem>>, vector<1x256xf32>
    %c239_i32 = arith.constant 239 : i32
    %88 = tpu.dynamic_rotate %48 by %c239_i32 dim 1 : vector<8x256xf32>, i32 -> vector<8x256xf32>
    %89 = vector.broadcast %87 : vector<1x256xf32> to vector<8x256xf32>
    %90 = arith.mulf %88, %89 : vector<8x256xf32>
    %c64 = arith.constant 64 : index
    %c0_42 = arith.constant 0 : index
    %91 = vector.load %arg13[%c64, %c0_42] : memref<72x256xf32, #tpu.memory_space<vmem>>, vector<8x256xf32>
    tpu.vector_store %arg13[%c64, %c0_42], %90 {strides = array<i32>} : memref<72x256xf32, #tpu.memory_space<vmem>>, vector<8x256xf32>,
    %c0_43 = arith.constant 0 : index
    %c0_44 = arith.constant 0 : index
    %92 = vector.load %arg8[%c0_43, %c0_44] : memref<32x72xf32, #tpu.memory_space<vmem>>, vector<32x72xf32>
    %c0_45 = arith.constant 0 : index
    %c0_46 = arith.constant 0 : index
    %93 = vector.load %arg13[%c0_45, %c0_46] : memref<72x256xf32, #tpu.memory_space<vmem>>, vector<72x256xf32>
    %cst_47 = arith.constant dense<0.000000e+00> : vector<32x256xf32>
    %94 = tpu.matmul %92, %93, %cst_47 {dimension_numbers = #tpu.dot_dimension_numbers<[1], [0], [0], [1], [0, 0, 1, 1], [], []>} : vector<32x72xf32>, vector<72x256xf32>, vector<32x256xf32> -> vector<32x256xf32>
    %c0_48 = arith.constant 0 : index
    %c0_49 = arith.constant 0 : index
    %95 = vector.load %arg9[%c0_48, %c0_49] : memref<32x1xf32, #tpu.memory_space<vmem>>, vector<32x1xf32>
    %96 = vector.broadcast %95 : vector<32x1xf32> to vector<32x256xf32>
    %97 = arith.addf %94, %96 : vector<32x256xf32>
    %c0_50 = arith.constant 0 : index
    %c0_51 = arith.constant 0 : index
    %98 = vector.load %arg10[%c0_50, %c0_51] : memref<24x8xf32, #tpu.memory_space<vmem>>, vector<24x8xf32>
    %cst_52 = arith.constant dense<0.000000e+00> : vector<24x256xf32>
    %99 = tpu.matmul %98, %50, %cst_52 {dimension_numbers = #tpu.dot_dimension_numbers<[1], [0], [0], [1], [0, 0, 1, 1], [], []>} : vector<24x8xf32>, vector<8x256xf32>, vector<24x256xf32> -> vector<24x256xf32>
    %cst_53 = arith.constant dense<0.000000e+00> : vector<32xf32>
    %100 = vector.multi_reduction <add>, %97, %cst_53 [1] : vector<32x256xf32> to vector<32xf32>
    %101 = vector.shape_cast %100 : vector<32xf32> to vector<32x1xf32>
    %cst_54 = arith.constant 2.560000e+02 : f32
    %102 = vector.broadcast %cst_54 : f32 to vector<32x1xf32>
    %103 = arith.divf %101, %102 : vector<32x1xf32>
    %cst_55 = arith.constant dense<0.000000e+00> : vector<24xf32>
    %104 = vector.multi_reduction <add>, %99, %cst_55 [1] : vector<24x256xf32> to vector<24xf32>
    %105 = vector.shape_cast %104 : vector<24xf32> to vector<24x1xf32>
    %cst_56 = arith.constant 2.560000e+02 : f32
    %106 = vector.broadcast %cst_56 : f32 to vector<24x1xf32>
    %107 = arith.divf %105, %106 : vector<24x1xf32>
    %cst_57 = arith.constant dense<0.000000e+00> : vector<8xf32>
    %108 = vector.multi_reduction <add>, %50, %cst_57 [1] : vector<8x256xf32> to vector<8xf32>
    %109 = vector.shape_cast %108 : vector<8xf32> to vector<8x1xf32>
    %cst_58 = arith.constant 2.560000e+02 : f32
    %110 = vector.broadcast %cst_58 : f32 to vector<8x1xf32>
    %111 = arith.divf %109, %110 : vector<8x1xf32>
    %112 = tpu.concatenate %103, %107, %111 in 0 : vector<32x1xf32>, vector<24x1xf32>, vector<8x1xf32> -> vector<64x1xf32>
    %cst_59 = arith.constant dense<0xFF800000> : vector<1xf32>
    %113 = vector.multi_reduction <maximumf>, %112, %cst_59 [0] : vector<64x1xf32> to vector<1xf32>
    %114 = vector.shape_cast %113 : vector<1xf32> to vector<1x1xf32>
    %115 = vector.broadcast %114 : vector<1x1xf32> to vector<64x1xf32>
    %116 = arith.subf %112, %115 : vector<64x1xf32>
    %117 = math.exp %116 : vector<64x1xf32>
    %cst_60 = arith.constant dense<0.000000e+00> : vector<1xf32>
    %118 = vector.multi_reduction <add>, %117, %cst_60 [0] : vector<64x1xf32> to vector<1xf32>
    %119 = vector.shape_cast %118 : vector<1xf32> to vector<1x1xf32>
    %120 = tpu.reciprocal %119 : vector<1x1xf32> -> vector<1x1xf32>
    %121 = vector.broadcast %120 : vector<1x1xf32> to vector<64x1xf32>
    %122 = arith.mulf %117, %121 : vector<64x1xf32>
    %123 = vector.extract_strided_slice %122 {offsets = [0, 0], sizes = [32, 1], strides = [1, 1]} : vector<64x1xf32> to vector<32x1xf32>
    %124 = vector.extract_strided_slice %122 {offsets = [32, 0], sizes = [24, 1], strides = [1, 1]} : vector<64x1xf32> to vector<24x1xf32>
    %125 = vector.extract_strided_slice %122 {offsets = [56, 0], sizes = [8, 1], strides = [1, 1]} : vector<64x1xf32> to vector<8x1xf32>
    %126 = vector.extract_strided_slice %97 {offsets = [0, 0], sizes = [24, 256], strides = [1, 1]} : vector<32x256xf32> to vector<24x256xf32>
    %127 = vector.extract_strided_slice %123 {offsets = [0, 0], sizes = [24, 1], strides = [1, 1]} : vector<32x1xf32> to vector<24x1xf32>
    %128 = vector.broadcast %127 : vector<24x1xf32> to vector<24x256xf32>
    %129 = arith.mulf %126, %128 : vector<24x256xf32>
    %130 = vector.broadcast %124 : vector<24x1xf32> to vector<24x256xf32>
    %131 = arith.mulf %99, %130 : vector<24x256xf32>
    %132 = arith.addf %129, %131 : vector<24x256xf32>
    %c0_61 = arith.constant 0 : index
    %c0_62 = arith.constant 0 : index
    %c0_63 = arith.constant 0 : index
    %133 = vector.load %arg12[%c0_61, %c0_62, %c0_63] : memref<1x32x256xf32, #tpu.memory_space<vmem>>, vector<1x24x256xf32>
    %134 = vector.shape_cast %133 : vector<1x24x256xf32> to vector<24x256xf32>
    %135 = vector.shape_cast %132 : vector<24x256xf32> to vector<1x24x256xf32>
    tpu.vector_store %arg12[%c0_61, %c0_62, %c0_63], %135 {strides = array<i32>} : memref<1x32x256xf32, #tpu.memory_space<vmem>>, vector<1x24x256xf32>,
    %136 = vector.extract_strided_slice %97 {offsets = [24, 0], sizes = [8, 256], strides = [1, 1]} : vector<32x256xf32> to vector<8x256xf32>
    %137 = vector.extract_strided_slice %123 {offsets = [24, 0], sizes = [8, 1], strides = [1, 1]} : vector<32x1xf32> to vector<8x1xf32>
    %138 = vector.broadcast %137 : vector<8x1xf32> to vector<8x256xf32>
    %139 = arith.mulf %136, %138 : vector<8x256xf32>
    %140 = vector.broadcast %125 : vector<8x1xf32> to vector<8x256xf32>
    %141 = arith.mulf %50, %140 : vector<8x256xf32>
    %142 = arith.addf %139, %141 : vector<8x256xf32>
    %c0_64 = arith.constant 0 : index
    %c24_65 = arith.constant 24 : index
    %c0_66 = arith.constant 0 : index
    %143 = vector.load %arg12[%c0_64, %c24_65, %c0_66] : memref<1x32x256xf32, #tpu.memory_space<vmem>>, vector<1x8x256xf32>
    %144 = vector.shape_cast %143 : vector<1x8x256xf32> to vector<8x256xf32>
    %145 = vector.shape_cast %142 : vector<8x256xf32> to vector<1x8x256xf32>
    tpu.vector_store %arg12[%c0_64, %c24_65, %c0_66], %145 {strides = array<i32>} : memref<1x32x256xf32, #tpu.memory_space<vmem>>, vector<1x8x256xf32>,
    return
  }
  func.func @transform_0(%arg0: i32) -> (i32, i32, i32) {
    %c0_i32 = arith.constant 0 : i32
    %c0_i32_0 = arith.constant 0 : i32
    %c0_i32_1 = arith.constant 0 : i32
    return %arg0, %c0_i32, %c0_i32_0 : i32, i32, i32
  }
  func.func @transform_1(%arg0: i32) -> (i32, i32) {
    %c0_i32 = arith.constant 0 : i32
    %c0_i32_0 = arith.constant 0 : i32
    %c0_i32_1 = arith.constant 0 : i32
    return %c0_i32, %c0_i32_0 : i32, i32
  }
  func.func @transform_2(%arg0: i32) -> (i32, i32) {
    %c0_i32 = arith.constant 0 : i32
    %c0_i32_0 = arith.constant 0 : i32
    %c0_i32_1 = arith.constant 0 : i32
    return %c0_i32, %c0_i32_0 : i32, i32
  }
  func.func @transform_3(%arg0: i32) -> (i32, i32) {
    %c0_i32 = arith.constant 0 : i32
    %c0_i32_0 = arith.constant 0 : i32
    %c0_i32_1 = arith.constant 0 : i32
    return %c0_i32, %c0_i32_0 : i32, i32
  }
  func.func @transform_4(%arg0: i32) -> (i32, i32) {
    %c0_i32 = arith.constant 0 : i32
    %c0_i32_0 = arith.constant 0 : i32
    %c0_i32_1 = arith.constant 0 : i32
    return %c0_i32, %c0_i32_0 : i32, i32
  }
  func.func @transform_5(%arg0: i32) -> (i32, i32) {
    %c0_i32 = arith.constant 0 : i32
    %c0_i32_0 = arith.constant 0 : i32
    %c0_i32_1 = arith.constant 0 : i32
    return %c0_i32, %c0_i32_0 : i32, i32
  }
  func.func @transform_6(%arg0: i32) -> (i32, i32) {
    %c0_i32 = arith.constant 0 : i32
    %c0_i32_0 = arith.constant 0 : i32
    %c0_i32_1 = arith.constant 0 : i32
    return %c0_i32, %c0_i32_0 : i32, i32
  }
  func.func @transform_7(%arg0: i32) -> (i32, i32) {
    %c0_i32 = arith.constant 0 : i32
    %c0_i32_0 = arith.constant 0 : i32
    %c0_i32_1 = arith.constant 0 : i32
    return %c0_i32, %c0_i32_0 : i32, i32
  }
  func.func @transform_8(%arg0: i32) -> (i32, i32) {
    %c0_i32 = arith.constant 0 : i32
    %c0_i32_0 = arith.constant 0 : i32
    %c0_i32_1 = arith.constant 0 : i32
    return %c0_i32, %c0_i32_0 : i32, i32
  }
  func.func @transform_9(%arg0: i32) -> (i32, i32) {
    %c0_i32 = arith.constant 0 : i32
    %c0_i32_0 = arith.constant 0 : i32
    %c0_i32_1 = arith.constant 0 : i32
    return %c0_i32, %c0_i32_0 : i32, i32
  }
  func.func @transform_10(%arg0: i32) -> (i32, i32) {
    %c0_i32 = arith.constant 0 : i32
    %c0_i32_0 = arith.constant 0 : i32
    %c0_i32_1 = arith.constant 0 : i32
    return %c0_i32, %c0_i32_0 : i32, i32
  }
  func.func @transform_11(%arg0: i32) -> (i32, i32, i32) {
    %c0_i32 = arith.constant 0 : i32
    %c0_i32_0 = arith.constant 0 : i32
    %c0_i32_1 = arith.constant 0 : i32
    return %arg0, %c0_i32, %c0_i32_0 : i32, i32, i32
  }
}

</mosaic_0001>

<llo_original>
// kernel: tpu_custom_call.1
$region0: #{tpu_custom_call.1}
  #allocation0 [shape = 'u32[]', space=smem, size = 0x4, offset = 0x4, fixed_abs, tag = 'smem constant byte address 0x4 - core index']
  #allocation1 [shape = 'u32[144,128]{1,0:T(1,128)}', space=vmem, size = 0x12000, scoped, tag = 'internal scratch']
  #allocation2 [shape = 'f32[72,256]{1,0:T(8,128)}', space=vmem, size = 0x12000, scoped, tag = 'scratch operand']
  %s0 = inlined_call_operand.vmem [shape: f32[2,32,256], index: 0, kind: input, shape index: {}]
  %s1 = inlined_call_operand.vmem [shape: f32[32,1], index: 1, kind: input, shape index: {}]
  %s2 = inlined_call_operand.vmem [shape: f32[32,1], index: 2, kind: input, shape index: {}]
  %s3 = inlined_call_operand.vmem [shape: f32[32,1], index: 3, kind: input, shape index: {}]
  %s4 = inlined_call_operand.vmem [shape: f32[32,32], index: 4, kind: input, shape index: {}]
  %s5 = inlined_call_operand.hbm [shape: f32[8,16], index: 5, kind: input, shape index: {}]
  %s6 = inlined_call_operand.hbm [shape: f32[8,16], index: 6, kind: input, shape index: {}]
  %s7 = inlined_call_operand.hbm [shape: f32[32,72], index: 7, kind: input, shape index: {}]
  %s8 = inlined_call_operand.vmem [shape: f32[32,1], index: 8, kind: input, shape index: {}]
  %s9 = inlined_call_operand.vmem [shape: f32[24,8], index: 9, kind: input, shape index: {}]
  %s10 = inlined_call_operand.vmem [shape: f32[8,256], index: 10, kind: input, shape index: {}]
  %s11 = inlined_call_operand.hbm [shape: f32[2,32,256], index: 11, kind: output, shape index: {}]
  %s12 = sld [smem:[#allocation0]]
  $region89: #{tpu_custom_call.1} parent=0
    _
  %s14 = ssub.s32 1, %s12
  %s15 = scalar_select 0, %s14, %s12
  $region1: #{tpu_custom_call.1} parent=0
    #allocation3 [shape = 'u8[4096]{0}', space=vmem, size = 0x1000, scoped, tag = 'input window, operand 5, single buffered']
    #allocation4 [shape = 's32[2]{0}', space=sflag, size = 0x8, scoped, tag = 'scoped memory for tpu_custom_call.1']
    #allocation5 [shape = 's32[2]{0}', space=sflag, size = 0x8, scoped, tag = 'scoped memory for tpu_custom_call.1']
    #allocation6 [shape = 'u8[4096]{0}', space=vmem, size = 0x1000, scoped, tag = 'input window, operand 6, single buffered']
    #allocation7 [shape = 's32[1]{0}', space=sflag, size = 0x4, scoped, tag = 'scoped memory for tpu_custom_call.1']
    #allocation8 [shape = 'u8[16384]{0}', space=vmem, size = 0x4000, scoped, tag = 'input window, operand 7, single buffered']
    #allocation9 [shape = 'u8[65536]{0}', space=vmem, size = 0x10000, scoped, tag = 'output window, operand 0']
    %16 = vsyncpa [#allocation4], 0
    %17 = vsyncpa [#allocation7], 0
    %18 = vsyncpa [#allocation5], 0
    %s19 = scalar_lea.sflag [#allocation5], 1
    %20 = vsyncpa %s19, 0
    loop: start=0, step=1, limit=4
    $region2: #{tpu_custom_call.1} parent=1 // loop_pre_header
      _
    $region3: #{tpu_custom_call.1} parent=1 // loop_header
      %s22 = sphi 0, %s26
      %p23 = scmp.ge.s32.totalorder %s22, 4
      %s32 = sphi 0, %s34
      %s35 = sphi 0, %s32
      %s36 = sphi 0, %s35
      %s52 = sphi 0, %s36
      %s56 = sphi 0, %s56
      %s58 = sphi 0, %s56
      %s59 = sphi 0, %s58
      %s73 = sphi 0, %s59
      %s77 = sphi 0, %s77
      %s79 = sphi 0, %s77
      %s80 = sphi 0, %s79
      %s94 = sphi 0, %s80
      %s98 = sphi 0, %s98
      %s100 = sphi 0, %s98
      %s101 = sphi 0, %s100
      %s115 = sphi 0, %s101
      %s119 = sphi 0, %s119
      %s121 = sphi 0, %s119
      %s122 = sphi 0, %s121
      %s136 = sphi 0, %s122
      %s140 = sphi 0, %s140
      %s142 = sphi 0, %s140
      %s143 = sphi 0, %s142
      %s157 = sphi 0, %s143
      %s161 = sphi 0, %s161
      %s163 = sphi 0, %s161
      %s164 = sphi 0, %s163
      %s178 = sphi 0, %s164
      %s182 = sphi 0, %s182
      %s184 = sphi 0, %s182
      %s185 = sphi 0, %s184
      %s199 = sphi 0, %s185
      %s203 = sphi 0, %s203
      %s205 = sphi 0, %s203
      %s206 = sphi 0, %s205
      %s220 = sphi 0, %s206
      %s224 = sphi 0, %s224
      %s226 = sphi 0, %s224
      %s227 = sphi 0, %s226
      %s241 = sphi 0, %s227
      %s245 = sphi 0, %s245
      %s247 = sphi 0, %s245
      %s248 = sphi 0, %s247
      %s262 = sphi 0, %s248
      %s268 = sphi 0, %s270
      %s271 = sphi 0, %s268
      %s272 = sphi 0, %s271
      %s288 = sphi 0, %s272
    $region4: #{tpu_custom_call.1} parent=1 // loop_header_branch
      %25 = sbr.rel (%p23) target = $region8
    $region5: #{tpu_custom_call.1} parent=1 // loop_body
      %s27 = ssub.s32 %s22, 1
      %s28 = ssub.s32 %s22, 2
      %s29 = sadd.s32 %s22, 1
      %s30 = ssub.s32 %s22, %s29
      %p31 = scmp.eq.s32.totalorder %s30, 0
      %s33 = sadd.s32 %s32, 1
      %s34 = scalar_select %p31, %s32, %s33
      %p37 = pneg %p31
      %p38 = scmp.eq.s32.totalorder %s22, 1
      %p39 = por %p37, %p38
      %p40 = scmp.ne.s32.totalorder %s32, %s35
      %p41 = scmp.eq.s32.totalorder %s22, 0
      %p42 = por %p40, %p41
      %p43 = scmp.ne.s32.totalorder %s32, %s35
      %p44 = scmp.eq.s32.totalorder %s27, 1
      %p45 = por %p43, %p44
      %p46 = scmp.ne.s32.totalorder %s35, %s36
      %p47 = scmp.eq.s32.totalorder %s27, 0
      %p48 = por %p46, %p47
      %p49 = scmp.ne.s32.totalorder %s35, %s36
      %p50 = scmp.eq.s32.totalorder %s28, 1
      %p51 = por %p49, %p50
      %p53 = scmp.ne.s32.totalorder %s36, %s52
      %p54 = scmp.eq.s32.totalorder %s28, 0
      %p55 = por %p53, %p54
      %s57 = sadd.s32 %s56, 1
      %p60 = scmp.eq.s32.totalorder %s22, 1
      %p61 = scmp.ne.s32.totalorder %s56, %s58
      %p62 = scmp.eq.s32.totalorder %s22, 0
      %p63 = por %p61, %p62
      %p64 = scmp.ne.s32.totalorder %s56, %s58
      %p65 = scmp.eq.s32.totalorder %s27, 1
      %p66 = por %p64, %p65
      %p67 = scmp.ne.s32.totalorder %s58, %s59
      %p68 = scmp.eq.s32.totalorder %s27, 0
      %p69 = por %p67, %p68
      %p70 = scmp.ne.s32.totalorder %s58, %s59
      %p71 = scmp.eq.s32.totalorder %s28, 1
      %p72 = por %p70, %p71
      %p74 = scmp.ne.s32.totalorder %s59, %s73
      %p75 = scmp.eq.s32.totalorder %s28, 0
      %p76 = por %p74, %p75
      %s78 = sadd.s32 %s77, 1
      %p81 = scmp.eq.s32.totalorder %s22, 1
      %p82 = scmp.ne.s32.totalorder %s77, %s79
      %p83 = scmp.eq.s32.totalorder %s22, 0
      %p84 = por %p82, %p83
      %p85 = scmp.ne.s32.totalorder %s77, %s79
      %p86 = scmp.eq.s32.totalorder %s27, 1
      %p87 = por %p85, %p86
      %p88 = scmp.ne.s32.totalorder %s79, %s80
      %p89 = scmp.eq.s32.totalorder %s27, 0
      %p90 = por %p88, %p89
      %p91 = scmp.ne.s32.totalorder %s79, %s80
      %p92 = scmp.eq.s32.totalorder %s28, 1
      %p93 = por %p91, %p92
      %p95 = scmp.ne.s32.totalorder %s80, %s94
      %p96 = scmp.eq.s32.totalorder %s28, 0
      %p97 = por %p95, %p96
      %s99 = sadd.s32 %s98, 1
      %p102 = scmp.eq.s32.totalorder %s22, 1
      %p103 = scmp.ne.s32.totalorder %s98, %s100
      %p104 = scmp.eq.s32.totalorder %s22, 0
      %p105 = por %p103, %p104
      %p106 = scmp.ne.s32.totalorder %s98, %s100
      %p107 = scmp.eq.s32.totalorder %s27, 1
      %p108 = por %p106, %p107
      %p109 = scmp.ne.s32.totalorder %s100, %s101
      %p110 = scmp.eq.s32.totalorder %s27, 0
      %p111 = por %p109, %p110
      %p112 = scmp.ne.s32.totalorder %s100, %s101
      %p113 = scmp.eq.s32.totalorder %s28, 1
      %p114 = por %p112, %p113
      %p116 = scmp.ne.s32.totalorder %s101, %s115
      %p117 = scmp.eq.s32.totalorder %s28, 0
      %p118 = por %p116, %p117
      %s120 = sadd.s32 %s119, 1
      %p123 = scmp.eq.s32.totalorder %s22, 1
      %p124 = scmp.ne.s32.totalorder %s119, %s121
      %p125 = scmp.eq.s32.totalorder %s22, 0
      %p126 = por %p124, %p125
      %p127 = scmp.ne.s32.totalorder %s119, %s121
      %p128 = scmp.eq.s32.totalorder %s27, 1
      %p129 = por %p127, %p128
      %p130 = scmp.ne.s32.totalorder %s121, %s122
      %p131 = scmp.eq.s32.totalorder %s27, 0
      %p132 = por %p130, %p131
      %p133 = scmp.ne.s32.totalorder %s121, %s122
      %p134 = scmp.eq.s32.totalorder %s28, 1
      %p135 = por %p133, %p134
      %p137 = scmp.ne.s32.totalorder %s122, %s136
      %p138 = scmp.eq.s32.totalorder %s28, 0
      %p139 = por %p137, %p138
      %s141 = sadd.s32 %s140, 1
      %p144 = scmp.eq.s32.totalorder %s22, 1
      %p145 = scmp.ne.s32.totalorder %s140, %s142
      %p146 = scmp.eq.s32.totalorder %s22, 0
      %p147 = por %p145, %p146
      %p148 = scmp.ne.s32.totalorder %s140, %s142
      %p149 = scmp.eq.s32.totalorder %s27, 1
      %p150 = por %p148, %p149
      %p151 = scmp.ne.s32.totalorder %s142, %s143
      %p152 = scmp.eq.s32.totalorder %s27, 0
      %p153 = por %p151, %p152
      %p154 = scmp.ne.s32.totalorder %s142, %s143
      %p155 = scmp.eq.s32.totalorder %s28, 1
      %p156 = por %p154, %p155
      %p158 = scmp.ne.s32.totalorder %s143, %s157
      %p159 = scmp.eq.s32.totalorder %s28, 0
      %p160 = por %p158, %p159
      %s162 = sadd.s32 %s161, 1
      %p165 = scmp.eq.s32.totalorder %s22, 1
      %p166 = scmp.ne.s32.totalorder %s161, %s163
      %p167 = scmp.eq.s32.totalorder %s22, 0
      %p168 = por %p166, %p167
      %p169 = scmp.ne.s32.totalorder %s161, %s163
      %p170 = scmp.eq.s32.totalorder %s27, 1
      %p171 = por %p169, %p170
      %p172 = scmp.ne.s32.totalorder %s163, %s164
      %p173 = scmp.eq.s32.totalorder %s27, 0
      %p174 = por %p172, %p173
      %p175 = scmp.ne.s32.totalorder %s163, %s164
      %p176 = scmp.eq.s32.totalorder %s28, 1
      %p177 = por %p175, %p176
      %p179 = scmp.ne.s32.totalorder %s164, %s178
      %p180 = scmp.eq.s32.totalorder %s28, 0
      %p181 = por %p179, %p180
      %s183 = sadd.s32 %s182, 1
      %p186 = scmp.eq.s32.totalorder %s22, 1
      %p187 = scmp.ne.s32.totalorder %s182, %s184
      %p188 = scmp.eq.s32.totalorder %s22, 0
      %p189 = por %p187, %p188
      %p190 = scmp.ne.s32.totalorder %s182, %s184
      %p191 = scmp.eq.s32.totalorder %s27, 1
      %p192 = por %p190, %p191
      %p193 = scmp.ne.s32.totalorder %s184, %s185
      %p194 = scmp.eq.s32.totalorder %s27, 0
      %p195 = por %p193, %p194
      %p196 = scmp.ne.s32.totalorder %s184, %s185
      %p197 = scmp.eq.s32.totalorder %s28, 1
      %p198 = por %p196, %p197
      %p200 = scmp.ne.s32.totalorder %s185, %s199
      %p201 = scmp.eq.s32.totalorder %s28, 0
      %p202 = por %p200, %p201
      %s204 = sadd.s32 %s203, 1
      %p207 = scmp.eq.s32.totalorder %s22, 1
      %p208 = scmp.ne.s32.totalorder %s203, %s205
      %p209 = scmp.eq.s32.totalorder %s22, 0
      %p210 = por %p208, %p209
      %p211 = scmp.ne.s32.totalorder %s203, %s205
      %p212 = scmp.eq.s32.totalorder %s27, 1
      %p213 = por %p211, %p212
      %p214 = scmp.ne.s32.totalorder %s205, %s206
      %p215 = scmp.eq.s32.totalorder %s27, 0
      %p216 = por %p214, %p215
      %p217 = scmp.ne.s32.totalorder %s205, %s206
      %p218 = scmp.eq.s32.totalorder %s28, 1
      %p219 = por %p217, %p218
      %p221 = scmp.ne.s32.totalorder %s206, %s220
      %p222 = scmp.eq.s32.totalorder %s28, 0
      %p223 = por %p221, %p222
      %s225 = sadd.s32 %s224, 1
      %p228 = scmp.eq.s32.totalorder %s22, 1
      %p229 = scmp.ne.s32.totalorder %s224, %s226
      %p230 = scmp.eq.s32.totalorder %s22, 0
      %p231 = por %p229, %p230
      %p232 = scmp.ne.s32.totalorder %s224, %s226
      %p233 = scmp.eq.s32.totalorder %s27, 1
      %p234 = por %p232, %p233
      %p235 = scmp.ne.s32.totalorder %s226, %s227
      %p236 = scmp.eq.s32.totalorder %s27, 0
      %p237 = por %p235, %p236
      %p238 = scmp.ne.s32.totalorder %s226, %s227
      %p239 = scmp.eq.s32.totalorder %s28, 1
      %p240 = por %p238, %p239
      %p242 = scmp.ne.s32.totalorder %s227, %s241
      %p243 = scmp.eq.s32.totalorder %s28, 0
      %p244 = por %p242, %p243
      %s246 = sadd.s32 %s245, 1
      %p249 = scmp.eq.s32.totalorder %s22, 1
      %p250 = scmp.ne.s32.totalorder %s245, %s247
      %p251 = scmp.eq.s32.totalorder %s22, 0
      %p252 = por %p250, %p251
      %p253 = scmp.ne.s32.totalorder %s245, %s247
      %p254 = scmp.eq.s32.totalorder %s27, 1
      %p255 = por %p253, %p254
      %p256 = scmp.ne.s32.totalorder %s247, %s248
      %p257 = scmp.eq.s32.totalorder %s27, 0
      %p258 = por %p256, %p257
      %p259 = scmp.ne.s32.totalorder %s247, %s248
      %p260 = scmp.eq.s32.totalorder %s28, 1
      %p261 = por %p259, %p260
      %p263 = scmp.ne.s32.totalorder %s248, %s262
      %p264 = scmp.eq.s32.totalorder %s28, 0
      %p265 = por %p263, %p264
      %s266 = ssub.s32 %s22, %s29
      %p267 = scmp.eq.s32.totalorder %s266, 0
      %s269 = sadd.s32 %s268, 1
      %s270 = scalar_select %p267, %s268, %s269
      %p273 = pneg %p267
      %p274 = scmp.eq.s32.totalorder %s22, 1
      %p275 = por %p273, %p274
      %p276 = scmp.ne.s32.totalorder %s268, %s271
      %p277 = scmp.eq.s32.totalorder %s22, 0
      %p278 = por %p276, %p277
      %p279 = scmp.ne.s32.totalorder %s268, %s271
      %p280 = scmp.eq.s32.totalorder %s27, 1
      %p281 = por %p279, %p280
      %p282 = scmp.ne.s32.totalorder %s271, %s272
      %p283 = scmp.eq.s32.totalorder %s27, 0
      %p284 = por %p282, %p283
      %p285 = scmp.ne.s32.totalorder %s271, %s272
      %p286 = scmp.eq.s32.totalorder %s28, 1
      %p287 = por %p285, %p286
      %p289 = scmp.ne.s32.totalorder %s272, %s288
      %p290 = scmp.eq.s32.totalorder %s28, 0
      %p291 = por %p289, %p290
      %p292 = scmp.le.s32.totalorder 1, %s22
      %p293 = scmp.lt.s32.totalorder %s22, 3
      %p294 = pnand %p292, %p293
      %p295 = pneg %p294
      // Predicated region
      $region9: #{tpu_custom_call.1} parent=5 // pred_check
        _
      $region10: #{tpu_custom_call.1} parent=5 // pred_check_branch
        %297 = sbr.rel (%p294) target = $region12
      $region11: #{tpu_custom_call.1} parent=5 // pred_region
        %s298 = ssub.s32 %s22, 1
        // Predicated region
        $region13: #{tpu_custom_call.1} parent=11 // pred_check
          %p299 = pneg %p69
        $region14: #{tpu_custom_call.1} parent=11 // pred_check_branch
          %301 = sbr.rel (%p299) target = $region16
        $region15: #{tpu_custom_call.1} parent=11 // pred_region
          _
        $region16: #{tpu_custom_call.1} parent=11 // pred_fallthru
          _
        // Predicated region
        $region17: #{tpu_custom_call.1} parent=11 // pred_check
          %p302 = pneg %p90
        $region18: #{tpu_custom_call.1} parent=11 // pred_check_branch
          %304 = sbr.rel (%p302) target = $region20
        $region19: #{tpu_custom_call.1} parent=11 // pred_region
          _
        $region20: #{tpu_custom_call.1} parent=11 // pred_fallthru
          _
        // Predicated region
        $region21: #{tpu_custom_call.1} parent=11 // pred_check
          %p305 = pneg %p111
        $region22: #{tpu_custom_call.1} parent=11 // pred_check_branch
          %307 = sbr.rel (%p305) target = $region24
        $region23: #{tpu_custom_call.1} parent=11 // pred_region
          _
        $region24: #{tpu_custom_call.1} parent=11 // pred_fallthru
          _
        // Predicated region
        $region25: #{tpu_custom_call.1} parent=11 // pred_check
          %p308 = pneg %p132
        $region26: #{tpu_custom_call.1} parent=11 // pred_check_branch
          %310 = sbr.rel (%p308) target = $region28
        $region27: #{tpu_custom_call.1} parent=11 // pred_region
          _
        $region28: #{tpu_custom_call.1} parent=11 // pred_fallthru
          _
        // Predicated region
        $region29: #{tpu_custom_call.1} parent=11 // pred_check
          %p311 = pneg %p153
        $region30: #{tpu_custom_call.1} parent=11 // pred_check_branch
          %313 = sbr.rel (%p311) target = $region32
        $region31: #{tpu_custom_call.1} parent=11 // pred_region
          %s315 = ssub.s32 128, 128
          %316 = vsyncadd [#allocation4], %s315
          %s318 = sshll.u32 [#allocation3], 4
          %s319 = int_to_ptr.vmem [resolvable:$true] %s318
          %321 = dma.hbm_to_vmem [thread:$0]  %s5, 128, %s319, [#allocation4]
        $region32: #{tpu_custom_call.1} parent=11 // pred_fallthru
          _
        // Predicated region
        $region33: #{tpu_custom_call.1} parent=11 // pred_check
          %p322 = pneg %p174
        $region34: #{tpu_custom_call.1} parent=11 // pred_check_branch
          %324 = sbr.rel (%p322) target = $region36
        $region35: #{tpu_custom_call.1} parent=11 // pred_region
          %s326 = ssub.s32 128, 128
          %327 = vsyncadd [#allocation7], %s326
          %s329 = sshll.u32 [#allocation6], 4
          %s330 = int_to_ptr.vmem [resolvable:$true] %s329
          %332 = dma.hbm_to_vmem [thread:$0]  %s6, 128, %s330, [#allocation7]
        $region36: #{tpu_custom_call.1} parent=11 // pred_fallthru
          _
        // Predicated region
        $region37: #{tpu_custom_call.1} parent=11 // pred_check
          %p333 = pneg %p195
        $region38: #{tpu_custom_call.1} parent=11 // pred_check_branch
          %335 = sbr.rel (%p333) target = $region40
        $region39: #{tpu_custom_call.1} parent=11 // pred_region
          %s337 = ssub.s32 512, 512
          %338 = vsyncadd [#allocation7], %s337
          %s339 = sshll.u32 [#allocation8], 4
          %s340 = int_to_ptr.vmem [resolvable:$true] %s339
          %345 = dma.hbm_to_vmem [thread:$0]  %s7, 512, %s340, [#allocation7], 128, 128, 8
        $region40: #{tpu_custom_call.1} parent=11 // pred_fallthru
          _
        // Predicated region
        $region41: #{tpu_custom_call.1} parent=11 // pred_check
          %p346 = pneg %p216
        $region42: #{tpu_custom_call.1} parent=11 // pred_check_branch
          %348 = sbr.rel (%p346) target = $region44
        $region43: #{tpu_custom_call.1} parent=11 // pred_region
          _
        $region44: #{tpu_custom_call.1} parent=11 // pred_fallthru
          _
        // Predicated region
        $region45: #{tpu_custom_call.1} parent=11 // pred_check
          %p349 = pneg %p237
        $region46: #{tpu_custom_call.1} parent=11 // pred_check_branch
          %351 = sbr.rel (%p349) target = $region48
        $region47: #{tpu_custom_call.1} parent=11 // pred_region
          _
        $region48: #{tpu_custom_call.1} parent=11 // pred_fallthru
          _
        // Predicated region
        $region49: #{tpu_custom_call.1} parent=11 // pred_check
          %p352 = pneg %p258
        $region50: #{tpu_custom_call.1} parent=11 // pred_check_branch
          %354 = sbr.rel (%p352) target = $region52
        $region51: #{tpu_custom_call.1} parent=11 // pred_region
          _
        $region52: #{tpu_custom_call.1} parent=11 // pred_fallthru
          _
      $region12: #{tpu_custom_call.1} parent=5 // pred_fallthru
        _
      %p355 = scmp.lt.s32.totalorder %s22, 2
      // Predicated region
      $region53: #{tpu_custom_call.1} parent=5 // pred_check
        %p356 = pneg %p355
      $region54: #{tpu_custom_call.1} parent=5 // pred_check_branch
        %358 = sbr.rel (%p356) target = $region56
      $region55: #{tpu_custom_call.1} parent=5 // pred_region
        // Predicated region
        $region57: #{tpu_custom_call.1} parent=55 // pred_check
          %p359 = pneg %p42
        $region58: #{tpu_custom_call.1} parent=55 // pred_check_branch
          %361 = sbr.rel (%p359) target = $region60
        $region59: #{tpu_custom_call.1} parent=55 // pred_region
          %p362 = scmp.lt.s32.totalorder %s22, 1
          %s363 = scalar_select %p362, %s22, 1
          %s364 = smul.addr %s363, 8
          %s365 = smul.addr %s364, 8
          %s366 = scalar_lea.vmem %s0, %s365
        $region60: #{tpu_custom_call.1} parent=55 // pred_fallthru
          _
      $region56: #{tpu_custom_call.1} parent=5 // pred_fallthru
        _
      %p367 = scmp.le.s32.totalorder 1, %s22
      %p368 = scmp.lt.s32.totalorder %s22, 3
      %p369 = pnand %p367, %p368
      %p370 = pneg %p369
      // Predicated region
      $region61: #{tpu_custom_call.1} parent=5 // pred_check
        _
      $region62: #{tpu_custom_call.1} parent=5 // pred_check_branch
        %372 = sbr.rel (%p369) target = $region64
      $region63: #{tpu_custom_call.1} parent=5 // pred_region
        %s373 = ssub.s32 %s22, 1
        // Predicated region
        $region65: #{tpu_custom_call.1} parent=63 // pred_check
          %p374 = pneg %p153
        $region66: #{tpu_custom_call.1} parent=63 // pred_check_branch
          %376 = sbr.rel (%p374) target = $region68
        $region67: #{tpu_custom_call.1} parent=63 // pred_region
          %377 = dma.done [#allocation4], 128
        $region68: #{tpu_custom_call.1} parent=63 // pred_fallthru
          _
        // Predicated region
        $region69: #{tpu_custom_call.1} parent=63 // pred_check
          %p378 = pneg %p174
        $region70: #{tpu_custom_call.1} parent=63 // pred_check_branch
          %380 = sbr.rel (%p378) target = $region72
        $region71: #{tpu_custom_call.1} parent=63 // pred_region
          %381 = dma.done [#allocation7], 128
        $region72: #{tpu_custom_call.1} parent=63 // pred_fallthru
          _
        // Predicated region
        $region73: #{tpu_custom_call.1} parent=63 // pred_check
          %p382 = pneg %p195
        $region74: #{tpu_custom_call.1} parent=63 // pred_check_branch
          %384 = sbr.rel (%p382) target = $region76
        $region75: #{tpu_custom_call.1} parent=63 // pred_region
          %385 = dma.done [#allocation7], 512
        $region76: #{tpu_custom_call.1} parent=63 // pred_fallthru
          _
        %p386 = scmp.lt.s32.totalorder %s27, 1
        %s387 = scalar_select %p386, %s27, 1
        %s388 = smul.addr %s387, 8
        %s389 = smul.addr %s388, 8
        %s390 = scalar_lea.vmem %s0, %s389
        %p391 = pneg %p48
        %p392 = pneg %p45
        %p393 = pneg %p69
        %p394 = pneg %p66
        %p395 = pneg %p90
        %p396 = pneg %p87
        %p397 = pneg %p111
        %p398 = pneg %p108
        %p399 = pneg %p132
        %p400 = pneg %p129
        %p401 = pneg %p153
        %p402 = pneg %p150
        %p403 = pneg %p174
        %p404 = pneg %p171
        %p405 = pneg %p195
        %p406 = pneg %p192
        %p407 = pneg %p216
        %p408 = pneg %p213
        %p409 = pneg %p237
        %p410 = pneg %p234
        %p411 = pneg %p258
        %p412 = pneg %p255
        %p413 = pneg %p284
        %p414 = pneg %p281
        %s415 = sand.u32 %s271, 1
        %s416 = scalar_lea.sflag [#allocation5], %s415
        %s417 = sand.u32 %s271, 1
        %s418 = smul.addr %s417, 64
        %s419 = scalar_lea.vmem [#allocation9], %s418
        %p420 = scmp.lt.s32.totalorder %s27, 1
        %s421 = scalar_select %p420, %s27, 1
        %s422 = smul.addr %s421, 8
        %s423 = smul.addr %s422, 8
        %s424 = scalar_lea.vmem %s0, %s423
        %v425 = vld [vmem:[%s424] sm:$0xff]
        %v426 = vld [vmem:[%s424 + $0x8] sm:$0xff]
        %v427 = vld [vmem:[%s424 + $0x10] sm:$0xff]
        %v428 = vld [vmem:[%s424 + $0x18] sm:$0xff]
        %v429 = vld [vmem:[%s424 + $0x20] sm:$0xff]
        %v430 = vld [vmem:[%s424 + $0x28] sm:$0xff]
        %v431 = vld [vmem:[%s424 + $0x30] sm:$0xff]
        %v432 = vld [vmem:[%s424 + $0x38] sm:$0xff]
        %v433 = vadd.f32 %v425, %v426
        %434 = vadd.xlane.f32.xlu0 %v433
        %v435 = vpop.xlane.xlu0 %434
        %v436 = vadd.f32 %v427, %v428
        %437 = vadd.xlane.f32.xlu0 %v436
        %v438 = vpop.xlane.xlu0 %437
        %v439 = vadd.f32 %v429, %v430
        %440 = vadd.xlane.f32.xlu0 %v439
        %v441 = vpop.xlane.xlu0 %440
        %v442 = vadd.f32 %v431, %v432
        %443 = vadd.xlane.f32.xlu0 %v442
        %v444 = vpop.xlane.xlu0 %443
        %v445 = vmul.f32 %v425, %v425
        %v446 = vmul.f32 %v426, %v426
        %v447 = vmul.f32 %v427, %v427
        %v448 = vmul.f32 %v428, %v428
        %v449 = vmul.f32 %v429, %v429
        %v450 = vmul.f32 %v430, %v430
        %v451 = vmul.f32 %v431, %v431
        %v452 = vmul.f32 %v432, %v432
        %v453 = vadd.f32 %v445, %v446
        %454 = vadd.xlane.f32.xlu0 %v453
        %v455 = vpop.xlane.xlu0 %454
        %v456 = vadd.f32 %v447, %v448
        %457 = vadd.xlane.f32.xlu0 %v456
        %v458 = vpop.xlane.xlu0 %457
        %v459 = vadd.f32 %v449, %v450
        %460 = vadd.xlane.f32.xlu0 %v459
        %v461 = vpop.xlane.xlu0 %460
        %v462 = vadd.f32 %v451, %v452
        %463 = vadd.xlane.f32.xlu0 %v462
        %v464 = vpop.xlane.xlu0 %463
        %v465 = vld [vmem:[%s4] sm:$0xff]
        %v466 = vld [vmem:[%s4 + $0x8] sm:$0xff]
        %v467 = vld [vmem:[%s4 + $0x10] sm:$0xff]
        %v468 = vld [vmem:[%s4 + $0x18] sm:$0xff]
        %vm469 = vcmask 7168
        %v470 = vsel %vm469, %v435, %v455
        %v471 = vsel %vm469, %v438, %v458
        %v472 = vsel %vm469, %v441, %v461
        %v473 = vsel %vm469, %v444, %v464
        %vm474 = vcmask 261120
        %v476 = vsel %vm474, %v465, 0
        %v479 = vsel %vm474, %v466, 0
        %v482 = vsel %vm474, %v467, 0
        %v485 = vsel %vm474, %v468, 0
        %487 = vmatprep.subr.mxu0 0.0
        %488 = vmatpush1.msra.mxu0 0.0
        %489 = vmatprep.subr.mxu0 0.0
        %490 = vmatpush1.msra.mxu0 0.0
        %491 = vmatprep.subr.mxu0 0.0
        %492 = vmatpush1.msra.mxu0 0.0
        %493 = vmatprep.subr.mxu0 0.0
        %494 = vmatpush1.msra.mxu0 0.0
        %495 = vmatprep.subr.mxu0 0.0
        %496 = vmatpush1.msra.mxu0 0.0
        %497 = vmatprep.subr.mxu0 0.0
        %498 = vmatpush1.msra.mxu0 0.0
        %499 = vmatprep.subr.mxu0 0.0
        %500 = vmatpush1.msra.mxu0 0.0
        %501 = vmatprep.subr.mxu0 0.0
        %502 = vmatpush1.msra.mxu0 0.0
        %503 = vmatprep.subr.mxu0 0.0
        %504 = vmatpush1.msra.mxu0 0.0
        %505 = vmatprep.subr.mxu0 0.0
        %506 = vmatpush1.msra.mxu0 0.0
        %507 = vmatprep.subr.mxu0 0.0
        %508 = vmatpush1.msra.mxu0 0.0
        %509 = vmatprep.subr.mxu0 0.0
        %510 = vmatpush1.msra.mxu0 0.0
        %511 = vmatprep.subr.mxu0 0.0
        %512 = vmatpush1.msra.mxu0 %v473
        %513 = vmatprep.subr.mxu0 0.0
        %514 = vmatpush1.msra.mxu0 %v472
        %515 = vmatprep.subr.mxu0 0.0
        %516 = vmatpush1.msra.mxu0 %v471
        %517 = vmatprep.subr.mxu0 0.0
        %518 = vmatpush1.msra.mxu0 %v470
        %519 = vmatprep.subr.mxu0 0.0
        %520 = vmatpush2.msra.mxu0 0.0
        %521 = vmatprep.subr.mxu0 0.0
        %522 = vmatpush2.msra.mxu0 0.0
        %523 = vmatprep.subr.mxu0 0.0
        %524 = vmatpush2.msra.mxu0 0.0
        %525 = vmatprep.subr.mxu0 0.0
        %526 = vmatpush2.msra.mxu0 0.0
        %527 = vmatprep.subr.mxu0 0.0
        %528 = vmatpush2.msra.mxu0 0.0
        %529 = vmatprep.subr.mxu0 0.0
        %530 = vmatpush2.msra.mxu0 0.0
        %531 = vmatprep.subr.mxu0 0.0
        %532 = vmatpush2.msra.mxu0 0.0
        %533 = vmatprep.subr.mxu0 0.0
        %534 = vmatpush2.msra.mxu0 0.0
        %535 = vmatprep.subr.mxu0 0.0
        %536 = vmatpush2.msra.mxu0 0.0
        %537 = vmatprep.subr.mxu0 0.0
        %538 = vmatpush2.msra.mxu0 0.0
        %539 = vmatprep.subr.mxu0 0.0
        %540 = vmatpush2.msra.mxu0 0.0
        %541 = vmatprep.subr.mxu0 0.0
        %542 = vmatpush2.msra.mxu0 0.0
        %543 = vmatprep.subr.mxu0 0.0
        %544 = vmatpush2.msra.mxu0 0.0
        %545 = vmatprep.subr.mxu0 0.0
        %546 = vmatpush2.msra.mxu0 0.0
        %547 = vmatprep.subr.mxu0 0.0
        %548 = vmatpush2.msra.mxu0 0.0
        %549 = vmatprep.subr.mxu0 0.0
        %550 = vmatpush2.msra.mxu0 0.0
        %551 = vmatprep.mubr.f32.mxu0 0.0
        %552 = vmatmul.mubr.f32.gmra.mxu0 %v476
        %v553 = vpop.f32.mrf.mxu0
        %v554 = vadd.f32 0.0, %v553
        %v555 = vpop.f32.mrf.mxu0
        %556 = vmatprep.mubr.f32.mxu0 0.0
        %557 = vmatmul.mubr.f32.gmra.mxu0 %v479
        %v558 = vpop.f32.mrf.mxu0
        %v559 = vadd.f32 0.0, %v558
        %v560 = vpop.f32.mrf.mxu0
        %561 = vmatprep.mubr.f32.mxu0 0.0
        %562 = vmatmul.mubr.f32.gmra.mxu0 %v482
        %v563 = vpop.f32.mrf.mxu0
        %v564 = vadd.f32 0.0, %v563
        %v565 = vpop.f32.mrf.mxu0
        %566 = vmatprep.mubr.f32.mxu0 0.0
        %567 = vmatmul.mubr.f32.gmra.mxu0 %v485
        %v568 = vpop.f32.mrf.mxu0
        %v569 = vadd.f32 0.0, %v568
        %v570 = vpop.f32.mrf.mxu0
        %571 = vdwg.mxu0
        %v572 = vmul.f32 %v554, 0.00048828125
        %v573 = vmul.f32 %v559, 0.00048828125
        %v574 = vmul.f32 %v564, 0.00048828125
        %v575 = vmul.f32 %v569, 0.00048828125
        %v576 = vmul.f32 %v554, %v572
        %v577 = vmul.f32 %v559, %v573
        %v578 = vmul.f32 %v564, %v574
        %v579 = vmul.f32 %v569, %v575
        %584 = vrot.lane.b32.xlu0 %v576, 1
        %v585 = vpop.permute.xlu0 %584
        %586 = vrot.lane.b32.xlu0 %v577, 1
        %v587 = vpop.permute.xlu0 %586
        %588 = vrot.lane.b32.xlu0 %v578, 1
        %v589 = vpop.permute.xlu0 %588
        %590 = vrot.lane.b32.xlu0 %v579, 1
        %v591 = vpop.permute.xlu0 %590
        %v596 = vsub.f32 %v554, %v585
        %v597 = vsub.f32 %v559, %v587
        %v598 = vsub.f32 %v564, %v589
        %v599 = vsub.f32 %v569, %v591
        %v600 = vmul.f32 %v596, 0.0004885198
        %v601 = vmul.f32 %v597, 0.0004885198
        %v602 = vmul.f32 %v598, 0.0004885198
        %v603 = vmul.f32 %v599, 0.0004885198
        %v604 = vmax.f32 %v600, 0.0
        %v605 = vmax.f32 %v601, 0.0
        %v606 = vmax.f32 %v602, 0.0
        %v607 = vmax.f32 %v603, 0.0
        %v608 = vrsqrt.pop %v604
        %v609 = vmul.f32 %v604, %v608
        %vm610 = vcmp.eq.f32.partialorder %v604, inf
        %v611 = vsel %vm610, %v604, %v609
        %vm612 = vcmp.eq.f32.partialorder %v604, 0.0
        %v613 = vand.u32 %v604, 2147483648
        %v614 = vsel %vm612, %v613, %v611
        %v615 = vrsqrt.pop %v605
        %v616 = vmul.f32 %v605, %v615
        %vm617 = vcmp.eq.f32.partialorder %v605, inf
        %v618 = vsel %vm617, %v605, %v616
        %vm619 = vcmp.eq.f32.partialorder %v605, 0.0
        %v620 = vand.u32 %v605, 2147483648
        %v621 = vsel %vm619, %v620, %v618
        %v622 = vrsqrt.pop %v606
        %v623 = vmul.f32 %v606, %v622
        %vm624 = vcmp.eq.f32.partialorder %v606, inf
        %v625 = vsel %vm624, %v606, %v623
        %vm626 = vcmp.eq.f32.partialorder %v606, 0.0
        %v627 = vand.u32 %v606, 2147483648
        %v628 = vsel %vm626, %v627, %v625
        %v629 = vrsqrt.pop %v607
        %v630 = vmul.f32 %v607, %v629
        %vm631 = vcmp.eq.f32.partialorder %v607, inf
        %v632 = vsel %vm631, %v607, %v630
        %vm633 = vcmp.eq.f32.partialorder %v607, 0.0
        %v634 = vand.u32 %v607, 2147483648
        %v635 = vsel %vm633, %v634, %v632
        %v636 = vadd.f32 %v614, 1e-10
        %v637 = vadd.f32 %v621, 1e-10
        %v638 = vadd.f32 %v628, 1e-10
        %v639 = vadd.f32 %v635, 1e-10
        %v640 = vrcp.pop %v636
        %v641 = vrcp.pop %v637
        %v642 = vrcp.pop %v638
        %v643 = vrcp.pop %v639
        %645 = vset.pattern.permute.xlu0 0
        %646 = vperm.xlu0 %645, %v572
        %v647 = vpop.permute.xlu0 %646
        %650 = vset.pattern.permute.xlu0 0
        %651 = vperm.xlu0 %650, %v573
        %v652 = vpop.permute.xlu0 %651
        %655 = vset.pattern.permute.xlu0 0
        %656 = vperm.xlu0 %655, %v574
        %v657 = vpop.permute.xlu0 %656
        %660 = vset.pattern.permute.xlu0 0
        %661 = vperm.xlu0 %660, %v575
        %v662 = vpop.permute.xlu0 %661
        %v664 = vsub.f32 %v425, %v647
        %v665 = vsub.f32 %v426, %v647
        %v666 = vsub.f32 %v427, %v652
        %v667 = vsub.f32 %v428, %v652
        %v668 = vsub.f32 %v429, %v657
        %v669 = vsub.f32 %v430, %v657
        %v670 = vsub.f32 %v431, %v662
        %v671 = vsub.f32 %v432, %v662
        %v672 = vld [vmem:[%s1] sm:$0xff]
        %v673 = vld [vmem:[%s1 + $0x8] sm:$0xff]
        %v674 = vld [vmem:[%s1 + $0x10] sm:$0xff]
        %v675 = vld [vmem:[%s1 + $0x18] sm:$0xff]
        %680 = vrot.lane.b32.xlu0 %v672, 1
        %v681 = vpop.permute.xlu0 %680
        %682 = vrot.lane.b32.xlu0 %v673, 1
        %v683 = vpop.permute.xlu0 %682
        %684 = vrot.lane.b32.xlu0 %v674, 1
        %v685 = vpop.permute.xlu0 %684
        %686 = vrot.lane.b32.xlu0 %v675, 1
        %v687 = vpop.permute.xlu0 %686
        %v692 = vmul.f32 %v640, %v681
        %v693 = vmul.f32 %v641, %v683
        %v694 = vmul.f32 %v642, %v685
        %v695 = vmul.f32 %v643, %v687
        %697 = vset.pattern.permute.xlu0 1
        %698 = vperm.xlu0 %697, %v692
        %v699 = vpop.permute.xlu0 %698
        %702 = vset.pattern.permute.xlu0 1
        %703 = vperm.xlu0 %702, %v693
        %v704 = vpop.permute.xlu0 %703
        %707 = vset.pattern.permute.xlu0 1
        %708 = vperm.xlu0 %707, %v694
        %v709 = vpop.permute.xlu0 %708
        %712 = vset.pattern.permute.xlu0 1
        %713 = vperm.xlu0 %712, %v695
        %v714 = vpop.permute.xlu0 %713
        %v716 = vmul.f32 %v664, %v699
        %v717 = vmul.f32 %v665, %v699
        %v718 = vmul.f32 %v666, %v704
        %v719 = vmul.f32 %v667, %v704
        %v720 = vmul.f32 %v668, %v709
        %v721 = vmul.f32 %v669, %v709
        %v722 = vmul.f32 %v670, %v714
        %v723 = vmul.f32 %v671, %v714
        %v724 = vld [vmem:[%s2] sm:$0xff]
        %v725 = vld [vmem:[%s2 + $0x8] sm:$0xff]
        %v726 = vld [vmem:[%s2 + $0x10] sm:$0xff]
        %v727 = vld [vmem:[%s2 + $0x18] sm:$0xff]
        %729 = vset.pattern.permute.xlu0 0
        %730 = vperm.xlu0 %729, %v724
        %v731 = vpop.permute.xlu0 %730
        %734 = vset.pattern.permute.xlu0 0
        %735 = vperm.xlu0 %734, %v725
        %v736 = vpop.permute.xlu0 %735
        %739 = vset.pattern.permute.xlu0 0
        %740 = vperm.xlu0 %739, %v726
        %v741 = vpop.permute.xlu0 %740
        %744 = vset.pattern.permute.xlu0 0
        %745 = vperm.xlu0 %744, %v727
        %v746 = vpop.permute.xlu0 %745
        %v748 = vadd.f32 %v716, %v731
        %v749 = vadd.f32 %v717, %v731
        %v750 = vadd.f32 %v718, %v736
        %v751 = vadd.f32 %v719, %v736
        %v752 = vadd.f32 %v720, %v741
        %v753 = vadd.f32 %v721, %v741
        %v754 = vadd.f32 %v722, %v746
        %v755 = vadd.f32 %v723, %v746
        %v756 = vld [vmem:[%s3] sm:$0xff]
        %v757 = vld [vmem:[%s3 + $0x8] sm:$0xff]
        %v758 = vld [vmem:[%s3 + $0x10] sm:$0xff]
        %v759 = vld [vmem:[%s3 + $0x18] sm:$0xff]
        %761 = vset.pattern.permute.xlu0 0
        %762 = vperm.xlu0 %761, %v756
        %v763 = vpop.permute.xlu0 %762
        %766 = vset.pattern.permute.xlu0 0
        %767 = vperm.xlu0 %766, %v757
        %v768 = vpop.permute.xlu0 %767
        %771 = vset.pattern.permute.xlu0 0
        %772 = vperm.xlu0 %771, %v758
        %v773 = vpop.permute.xlu0 %772
        %776 = vset.pattern.permute.xlu0 0
        %777 = vperm.xlu0 %776, %v759
        %v778 = vpop.permute.xlu0 %777
        %v780 = vmul.f32 %v748, %v763
        %v781 = vmul.f32 %v749, %v763
        %v782 = vmul.f32 %v750, %v768
        %v783 = vmul.f32 %v751, %v768
        %v784 = vmul.f32 %v752, %v773
        %v785 = vmul.f32 %v753, %v773
        %v786 = vmul.f32 %v754, %v778
        %v787 = vmul.f32 %v755, %v778
        %vm788 = vcmp.ge.f32.partialorder %v780, 0.0
        %vm789 = vcmp.ge.f32.partialorder %v781, 0.0
        %vm790 = vcmp.ge.f32.partialorder %v782, 0.0
        %vm791 = vcmp.ge.f32.partialorder %v783, 0.0
        %vm792 = vcmp.ge.f32.partialorder %v784, 0.0
        %vm793 = vcmp.ge.f32.partialorder %v785, 0.0
        %vm794 = vcmp.ge.f32.partialorder %v786, 0.0
        %vm795 = vcmp.ge.f32.partialorder %v787, 0.0
        %v796 = vsel %vm788, %v748, 0.0
        %v797 = vsel %vm789, %v749, 0.0
        %v798 = vsel %vm790, %v750, 0.0
        %v799 = vsel %vm791, %v751, 0.0
        %v800 = vsel %vm792, %v752, 0.0
        %v801 = vsel %vm793, %v753, 0.0
        %v802 = vsel %vm794, %v754, 0.0
        %v803 = vsel %vm795, %v755, 0.0
        %v804 = vsub.f32 %v748, %v796
        %v805 = vsub.f32 %v749, %v797
        %v806 = vsub.f32 %v750, %v798
        %v807 = vsub.f32 %v751, %v799
        %v808 = vsub.f32 %v752, %v800
        %v809 = vsub.f32 %v753, %v801
        %v810 = vsub.f32 %v754, %v802
        %v811 = vsub.f32 %v755, %v803
        %v812 = vadd.f32 %v796, %v808
        %v813 = vadd.f32 %v797, %v809
        %v814 = vadd.f32 %v798, %v810
        %v815 = vadd.f32 %v799, %v811
        %v816 = vadd.f32 %v800, %v804
        %v817 = vadd.f32 %v801, %v805
        %v818 = vadd.f32 %v802, %v806
        %v819 = vadd.f32 %v803, %v807
        %v820 = vld [vmem:[#allocation3] sm:$0xff]
        %vm821 = vcmask 130048
        %v823 = vsel %vm821, %v820, 0
        %825 = vmatprep.subr.mxu0 0.0
        %826 = vmatpush1.msra.mxu0 0.0
        %827 = vmatprep.subr.mxu0 0.0
        %828 = vmatpush1.msra.mxu0 0.0
        %829 = vmatprep.subr.mxu0 0.0
        %830 = vmatpush1.msra.mxu0 0.0
        %831 = vmatprep.subr.mxu0 0.0
        %832 = vmatpush1.msra.mxu0 0.0
        %833 = vmatprep.subr.mxu0 0.0
        %834 = vmatpush1.msra.mxu0 0.0
        %835 = vmatprep.subr.mxu0 0.0
        %836 = vmatpush1.msra.mxu0 0.0
        %837 = vmatprep.subr.mxu0 0.0
        %838 = vmatpush1.msra.mxu0 0.0
        %839 = vmatprep.subr.mxu0 0.0
        %840 = vmatpush1.msra.mxu0 0.0
        %841 = vmatprep.subr.mxu0 0.0
        %842 = vmatpush1.msra.mxu0 0.0
        %843 = vmatprep.subr.mxu0 0.0
        %844 = vmatpush1.msra.mxu0 0.0
        %845 = vmatprep.subr.mxu0 0.0
        %846 = vmatpush1.msra.mxu0 0.0
        %847 = vmatprep.subr.mxu0 0.0
        %848 = vmatpush1.msra.mxu0 0.0
        %849 = vmatprep.subr.mxu0 0.0
        %850 = vmatpush1.msra.mxu0 0.0
        %851 = vmatprep.subr.mxu0 0.0
        %852 = vmatpush1.msra.mxu0 0.0
        %853 = vmatprep.subr.mxu0 %v815
        %854 = vmatpush1.msra.mxu0 %v814
        %855 = vmatprep.subr.mxu0 %v813
        %856 = vmatpush1.msra.mxu0 %v812
        %857 = vmatprep.subr.mxu0 0.0
        %858 = vmatpush2.msra.mxu0 0.0
        %859 = vmatprep.subr.mxu0 0.0
        %860 = vmatpush2.msra.mxu0 0.0
        %861 = vmatprep.subr.mxu0 0.0
        %862 = vmatpush2.msra.mxu0 0.0
        %863 = vmatprep.subr.mxu0 0.0
        %864 = vmatpush2.msra.mxu0 0.0
        %865 = vmatprep.subr.mxu0 0.0
        %866 = vmatpush2.msra.mxu0 0.0
        %867 = vmatprep.subr.mxu0 0.0
        %868 = vmatpush2.msra.mxu0 0.0
        %869 = vmatprep.subr.mxu0 0.0
        %870 = vmatpush2.msra.mxu0 0.0
        %871 = vmatprep.subr.mxu0 0.0
        %872 = vmatpush2.msra.mxu0 0.0
        %873 = vmatprep.subr.mxu0 0.0
        %874 = vmatpush2.msra.mxu0 0.0
        %875 = vmatprep.subr.mxu0 0.0
        %876 = vmatpush2.msra.mxu0 0.0
        %877 = vmatprep.subr.mxu0 0.0
        %878 = vmatpush2.msra.mxu0 0.0
        %879 = vmatprep.subr.mxu0 0.0
        %880 = vmatpush2.msra.mxu0 0.0
        %881 = vmatprep.subr.mxu0 0.0
        %882 = vmatpush2.msra.mxu0 0.0
        %883 = vmatprep.subr.mxu0 0.0
        %884 = vmatpush2.msra.mxu0 0.0
        %885 = vmatprep.subr.mxu0 0.0
        %886 = vmatpush2.msra.mxu0 0.0
        %887 = vmatprep.subr.mxu0 0.0
        %888 = vmatpush2.msra.mxu0 0.0
        %889 = vmatprep.mubr.f32.mxu0 0.0
        %890 = vmatmul.mubr.f32.gmra.mxu0 %v823
        %v891 = vpop.f32.mrf.mxu0
        %v892 = vadd.f32 0.0, %v891
        %v893 = vpop.f32.mrf.mxu0
        %v894 = vadd.f32 0.0, %v893
        %895 = vdwg.mxu0
        %v896 = vld [vmem:[#allocation6] sm:$0xff]
        %v898 = vsel %vm821, %v896, 0
        %900 = vmatprep.subr.mxu0 0.0
        %901 = vmatpush1.msra.mxu0 0.0
        %902 = vmatprep.subr.mxu0 0.0
        %903 = vmatpush1.msra.mxu0 0.0
        %904 = vmatprep.subr.mxu0 0.0
        %905 = vmatpush1.msra.mxu0 0.0
        %906 = vmatprep.subr.mxu0 0.0
        %907 = vmatpush1.msra.mxu0 0.0
        %908 = vmatprep.subr.mxu0 0.0
        %909 = vmatpush1.msra.mxu0 0.0
        %910 = vmatprep.subr.mxu0 0.0
        %911 = vmatpush1.msra.mxu0 0.0
        %912 = vmatprep.subr.mxu0 0.0
        %913 = vmatpush1.msra.mxu0 0.0
        %914 = vmatprep.subr.mxu0 0.0
        %915 = vmatpush1.msra.mxu0 0.0
        %916 = vmatprep.subr.mxu0 0.0
        %917 = vmatpush1.msra.mxu0 0.0
        %918 = vmatprep.subr.mxu0 0.0
        %919 = vmatpush1.msra.mxu0 0.0
        %920 = vmatprep.subr.mxu0 0.0
        %921 = vmatpush1.msra.mxu0 0.0
        %922 = vmatprep.subr.mxu0 0.0
        %923 = vmatpush1.msra.mxu0 0.0
        %924 = vmatprep.subr.mxu0 0.0
        %925 = vmatpush1.msra.mxu0 0.0
        %926 = vmatprep.subr.mxu0 0.0
        %927 = vmatpush1.msra.mxu0 0.0
        %928 = vmatprep.subr.mxu0 %v819
        %929 = vmatpush1.msra.mxu0 %v818
        %930 = vmatprep.subr.mxu0 %v817
        %931 = vmatpush1.msra.mxu0 %v816
        %932 = vmatprep.subr.mxu0 0.0
        %933 = vmatpush2.msra.mxu0 0.0
        %934 = vmatprep.subr.mxu0 0.0
        %935 = vmatpush2.msra.mxu0 0.0
        %936 = vmatprep.subr.mxu0 0.0
        %937 = vmatpush2.msra.mxu0 0.0
        %938 = vmatprep.subr.mxu0 0.0
        %939 = vmatpush2.msra.mxu0 0.0
        %940 = vmatprep.subr.mxu0 0.0
        %941 = vmatpush2.msra.mxu0 0.0
        %942 = vmatprep.subr.mxu0 0.0
        %943 = vmatpush2.msra.mxu0 0.0
        %944 = vmatprep.subr.mxu0 0.0
        %945 = vmatpush2.msra.mxu0 0.0
        %946 = vmatprep.subr.mxu0 0.0
        %947 = vmatpush2.msra.mxu0 0.0
        %948 = vmatprep.subr.mxu0 0.0
        %949 = vmatpush2.msra.mxu0 0.0
        %950 = vmatprep.subr.mxu0 0.0
        %951 = vmatpush2.msra.mxu0 0.0
        %952 = vmatprep.subr.mxu0 0.0
        %953 = vmatpush2.msra.mxu0 0.0
        %954 = vmatprep.subr.mxu0 0.0
        %955 = vmatpush2.msra.mxu0 0.0
        %956 = vmatprep.subr.mxu0 0.0
        %957 = vmatpush2.msra.mxu0 0.0
        %958 = vmatprep.subr.mxu0 0.0
        %959 = vmatpush2.msra.mxu0 0.0
        %960 = vmatprep.subr.mxu0 0.0
        %961 = vmatpush2.msra.mxu0 0.0
        %962 = vmatprep.subr.mxu0 0.0
        %963 = vmatpush2.msra.mxu0 0.0
        %964 = vmatprep.mubr.f32.mxu0 0.0
        %965 = vmatmul.mubr.f32.gmra.mxu0 %v898
        %v966 = vpop.f32.mrf.mxu0
        %v967 = vadd.f32 0.0, %v966
        %v968 = vpop.f32.mrf.mxu0
        %v969 = vadd.f32 0.0, %v968
        %970 = vdwg.mxu0
        %971 = vst [vmem:[#allocation2 + $0x40] sm:$0xff] %v892
        %972 = vst [vmem:[#allocation2 + $0x48] sm:$0xff] %v894
        %v973 = vld [vmem:[%s10] ss:$8 sm:$0x3]
        %974 = vrot.lane.b32.xlu0 %v892, 17
        %v975 = vpop.permute.xlu0 %974
        %976 = vrot.lane.b32.xlu0 %v894, 17
        %v977 = vpop.permute.xlu0 %976
        %v978 = vlaneseq
        %v979 = vand.u32 %v978, 127
        %vm980 = vcmp.lt.s32.totalorder %v979, 17
        %v981 = vsel %vm980, %v975, %v977
        %v982 = vsel %vm980, %v977, %v975
        %v984 = vlaneseq
        %v985 = vshrl.u32 %v984, 7
        %v986 = vsub.s32 0, %v985
        %v987 = vrot.slane %v973, %v986
        %v988 = vlaneseq
        %v989 = vshrl.u32 %v988, 7
        %v990 = vsub.s32 1, %v989
        %v991 = vrot.slane %v973, %v990
        %v994 = vmul.f32 %v982, %v987
        %v995 = vmul.f32 %v981, %v991
        %996 = vst [vmem:[#allocation2] sm:$0xff] %v994
        %997 = vst [vmem:[#allocation2 + $0x8] sm:$0xff] %v995
        %s998 = scalar_lea.vmem %s10, 1
        %v999 = vld [vmem:[%s998] ss:$8 sm:$0x3]
        %1000 = vrot.lane.b32.xlu0 %v892, 16
        %v1001 = vpop.permute.xlu0 %1000
        %1002 = vrot.lane.b32.xlu0 %v894, 16
        %v1003 = vpop.permute.xlu0 %1002
        %vm1004 = vcmp.lt.s32.totalorder %v979, 16
        %v1005 = vsel %vm1004, %v1001, %v1003
        %v1006 = vsel %vm1004, %v1003, %v1001
        %v1008 = vlaneseq
        %v1009 = vshrl.u32 %v1008, 7
        %v1010 = vsub.s32 0, %v1009
        %v1011 = vrot.slane %v999, %v1010
        %v1012 = vlaneseq
        %v1013 = vshrl.u32 %v1012, 7
        %v1014 = vsub.s32 1, %v1013
        %v1015 = vrot.slane %v999, %v1014
        %v1018 = vmul.f32 %v1006, %v1011
        %v1019 = vmul.f32 %v1005, %v1015
        %1020 = vst [vmem:[#allocation2 + $0x10] sm:$0xff] %v1018
        %1021 = vst [vmem:[#allocation2 + $0x18] sm:$0xff] %v1019
        %s1022 = scalar_lea.vmem %s10, 2
        %v1023 = vld [vmem:[%s1022] ss:$8 sm:$0x3]
        %1024 = vrot.lane.b32.xlu0 %v892, 15
        %v1025 = vpop.permute.xlu0 %1024
        %1026 = vrot.lane.b32.xlu0 %v894, 15
        %v1027 = vpop.permute.xlu0 %1026
        %vm1028 = vcmp.lt.s32.totalorder %v979, 15
        %v1029 = vsel %vm1028, %v1025, %v1027
        %v1030 = vsel %vm1028, %v1027, %v1025
        %v1032 = vlaneseq
        %v1033 = vshrl.u32 %v1032, 7
        %v1034 = vsub.s32 0, %v1033
        %v1035 = vrot.slane %v1023, %v1034
        %v1036 = vlaneseq
        %v1037 = vshrl.u32 %v1036, 7
        %v1038 = vsub.s32 1, %v1037
        %v1039 = vrot.slane %v1023, %v1038
        %v1042 = vmul.f32 %v1030, %v1035
        %v1043 = vmul.f32 %v1029, %v1039
        %1044 = vst [vmem:[#allocation2 + $0x20] sm:$0xff] %v1042
        %1045 = vst [vmem:[#allocation2 + $0x28] sm:$0xff] %v1043
        %s1046 = scalar_lea.vmem %s10, 3
        %v1047 = vld [vmem:[%s1046] ss:$8 sm:$0x3]
        %1048 = vrot.lane.b32.xlu0 %v892, 1
        %v1049 = vpop.permute.xlu0 %1048
        %1050 = vrot.lane.b32.xlu0 %v894, 1
        %v1051 = vpop.permute.xlu0 %1050
        %vm1052 = vcmp.lt.s32.totalorder %v979, 1
        %v1053 = vsel %vm1052, %v1049, %v1051
        %v1054 = vsel %vm1052, %v1051, %v1049
        %v1056 = vlaneseq
        %v1057 = vshrl.u32 %v1056, 7
        %v1058 = vsub.s32 0, %v1057
        %v1059 = vrot.slane %v1047, %v1058
        %v1060 = vlaneseq
        %v1061 = vshrl.u32 %v1060, 7
        %v1062 = vsub.s32 1, %v1061
        %v1063 = vrot.slane %v1047, %v1062
        %v1066 = vmul.f32 %v1054, %v1059
        %v1067 = vmul.f32 %v1053, %v1063
        %1068 = vst [vmem:[#allocation2 + $0x30] sm:$0xff] %v1066
        %1069 = vst [vmem:[#allocation2 + $0x38] sm:$0xff] %v1067
        %s1070 = scalar_lea.vmem %s10, 4
        %v1071 = vld [vmem:[%s1070] ss:$8 sm:$0x3]
        %1072 = vrot.lane.b32.xlu0 %v892, 127
        %v1073 = vpop.permute.xlu0 %1072
        %1074 = vrot.lane.b32.xlu0 %v894, 127
        %v1075 = vpop.permute.xlu0 %1074
        %vm1076 = vcmp.lt.s32.totalorder %v979, 127
        %v1077 = vsel %vm1076, %v1073, %v1075
        %v1078 = vsel %vm1076, %v1075, %v1073
        %v1080 = vlaneseq
        %v1081 = vshrl.u32 %v1080, 7
        %v1082 = vsub.s32 0, %v1081
        %v1083 = vrot.slane %v1071, %v1082
        %v1084 = vlaneseq
        %v1085 = vshrl.u32 %v1084, 7
        %v1086 = vsub.s32 1, %v1085
        %v1087 = vrot.slane %v1071, %v1086
        %v1090 = vmul.f32 %v1077, %v1083
        %v1091 = vmul.f32 %v1078, %v1087
        %1092 = vst [vmem:[#allocation2 + $0x50] sm:$0xff] %v1090
        %1093 = vst [vmem:[#allocation2 + $0x58] sm:$0xff] %v1091
        %s1094 = scalar_lea.vmem %s10, 5
        %v1095 = vld [vmem:[%s1094] ss:$8 sm:$0x3]
        %1096 = vrot.lane.b32.xlu0 %v892, 113
        %v1097 = vpop.permute.xlu0 %1096
        %1098 = vrot.lane.b32.xlu0 %v894, 113
        %v1099 = vpop.permute.xlu0 %1098
        %vm1100 = vcmp.lt.s32.totalorder %v979, 113
        %v1101 = vsel %vm1100, %v1097, %v1099
        %v1102 = vsel %vm1100, %v1099, %v1097
        %v1104 = vlaneseq
        %v1105 = vshrl.u32 %v1104, 7
        %v1106 = vsub.s32 0, %v1105
        %v1107 = vrot.slane %v1095, %v1106
        %v1108 = vlaneseq
        %v1109 = vshrl.u32 %v1108, 7
        %v1110 = vsub.s32 1, %v1109
        %v1111 = vrot.slane %v1095, %v1110
        %v1114 = vmul.f32 %v1101, %v1107
        %v1115 = vmul.f32 %v1102, %v1111
        %1116 = vst [vmem:[#allocation2 + $0x60] sm:$0xff] %v1114
        %1117 = vst [vmem:[#allocation2 + $0x68] sm:$0xff] %v1115
        %s1118 = scalar_lea.vmem %s10, 6
        %v1119 = vld [vmem:[%s1118] ss:$8 sm:$0x3]
        %1120 = vrot.lane.b32.xlu0 %v892, 112
        %v1121 = vpop.permute.xlu0 %1120
        %1122 = vrot.lane.b32.xlu0 %v894, 112
        %v1123 = vpop.permute.xlu0 %1122
        %vm1124 = vcmp.lt.s32.totalorder %v979, 112
        %v1125 = vsel %vm1124, %v1121, %v1123
        %v1126 = vsel %vm1124, %v1123, %v1121
        %v1128 = vlaneseq
        %v1129 = vshrl.u32 %v1128, 7
        %v1130 = vsub.s32 0, %v1129
        %v1131 = vrot.slane %v1119, %v1130
        %v1132 = vlaneseq
        %v1133 = vshrl.u32 %v1132, 7
        %v1134 = vsub.s32 1, %v1133
        %v1135 = vrot.slane %v1119, %v1134
        %v1138 = vmul.f32 %v1125, %v1131
        %v1139 = vmul.f32 %v1126, %v1135
        %1140 = vst [vmem:[#allocation2 + $0x70] sm:$0xff] %v1138
        %1141 = vst [vmem:[#allocation2 + $0x78] sm:$0xff] %v1139
        %s1142 = scalar_lea.vmem %s10, 7
        %v1143 = vld [vmem:[%s1142] ss:$8 sm:$0x3]
        %1144 = vrot.lane.b32.xlu0 %v892, 111
        %v1145 = vpop.permute.xlu0 %1144
        %1146 = vrot.lane.b32.xlu0 %v894, 111
        %v1147 = vpop.permute.xlu0 %1146
        %vm1148 = vcmp.lt.s32.totalorder %v979, 111
        %v1149 = vsel %vm1148, %v1145, %v1147
        %v1150 = vsel %vm1148, %v1147, %v1145
        %v1152 = vlaneseq
        %v1153 = vshrl.u32 %v1152, 7
        %v1154 = vsub.s32 0, %v1153
        %v1155 = vrot.slane %v1143, %v1154
        %v1156 = vlaneseq
        %v1157 = vshrl.u32 %v1156, 7
        %v1158 = vsub.s32 1, %v1157
        %v1159 = vrot.slane %v1143, %v1158
        %v1162 = vmul.f32 %v1149, %v1155
        %v1163 = vmul.f32 %v1150, %v1159
        %1164 = vst [vmem:[#allocation2 + $0x80] sm:$0xff] %v1162
        %1165 = vst [vmem:[#allocation2 + $0x88] sm:$0xff] %v1163
        %v1166 = vld [vmem:[#allocation8] sm:$0xff]
        %v1167 = vld [vmem:[#allocation8 + $0x8] sm:$0xff]
        %v1168 = vld [vmem:[#allocation8 + $0x10] sm:$0xff]
        %v1169 = vld [vmem:[#allocation8 + $0x18] sm:$0xff]
        %v1170 = vld [vmem:[#allocation2] sm:$0xff]
        %v1171 = vld [vmem:[#allocation2 + $0x8] sm:$0xff]
        %v1172 = vld [vmem:[#allocation2 + $0x10] sm:$0xff]
        %v1173 = vld [vmem:[#allocation2 + $0x18] sm:$0xff]
        %v1174 = vld [vmem:[#allocation2 + $0x20] sm:$0xff]
        %v1175 = vld [vmem:[#allocation2 + $0x28] sm:$0xff]
        %v1176 = vld [vmem:[#allocation2 + $0x30] sm:$0xff]
        %v1177 = vld [vmem:[#allocation2 + $0x38] sm:$0xff]
        %v1178 = vld [vmem:[#allocation2 + $0x40] sm:$0xff]
        %v1179 = vld [vmem:[#allocation2 + $0x48] sm:$0xff]
        %v1180 = vld [vmem:[#allocation2 + $0x50] sm:$0xff]
        %v1181 = vld [vmem:[#allocation2 + $0x58] sm:$0xff]
        %v1182 = vld [vmem:[#allocation2 + $0x60] sm:$0xff]
        %v1183 = vld [vmem:[#allocation2 + $0x68] sm:$0xff]
        %v1184 = vld [vmem:[#allocation2 + $0x70] sm:$0xff]
        %v1185 = vld [vmem:[#allocation2 + $0x78] sm:$0xff]
        %v1186 = vld [vmem:[#allocation2 + $0x80] sm:$0xff]
        %v1187 = vld [vmem:[#allocation2 + $0x88] sm:$0xff]
        %v1188 = vld [vmem:[%s8] sm:$0xff]
        %v1189 = vld [vmem:[%s8 + $0x8] sm:$0xff]
        %v1190 = vld [vmem:[%s8 + $0x10] sm:$0xff]
        %v1191 = vld [vmem:[%s8 + $0x18] sm:$0xff]
        %1193 = vset.pattern.permute.xlu0 0
        %1194 = vperm.xlu0 %1193, %v1188
        %v1195 = vpop.permute.xlu0 %1194
        %1198 = vset.pattern.permute.xlu0 0
        %1199 = vperm.xlu0 %1198, %v1189
        %v1200 = vpop.permute.xlu0 %1199
        %1203 = vset.pattern.permute.xlu0 0
        %1204 = vperm.xlu0 %1203, %v1190
        %v1205 = vpop.permute.xlu0 %1204
        %1208 = vset.pattern.permute.xlu0 0
        %1209 = vperm.xlu0 %1208, %v1191
        %v1210 = vpop.permute.xlu0 %1209
        %vm1212 = vcmask 588800
        %v1214 = vsel %vm1212, %v1166, 0
        %v1217 = vsel %vm1212, %v1167, 0
        %v1220 = vsel %vm1212, %v1168, 0
        %v1223 = vsel %vm1212, %v1169, 0
        %1225 = vmatprep.subr.mxu0 0.0
        %1226 = vmatpush1.msra.mxu0 0.0
        %1227 = vmatprep.subr.mxu0 0.0
        %1228 = vmatpush1.msra.mxu0 0.0
        %1229 = vmatprep.subr.mxu0 0.0
        %1230 = vmatpush1.msra.mxu0 0.0
        %1231 = vmatprep.subr.mxu0 0.0
        %1232 = vmatpush1.msra.mxu0 0.0
        %1233 = vmatprep.subr.mxu0 0.0
        %1234 = vmatpush1.msra.mxu0 0.0
        %1235 = vmatprep.subr.mxu0 0.0
        %1236 = vmatpush1.msra.mxu0 0.0
        %1237 = vmatprep.subr.mxu0 0.0
        %1238 = vmatpush1.msra.mxu0 0.0
        %1239 = vmatprep.subr.mxu0 %v1187
        %1240 = vmatpush1.msra.mxu0 %v1186
        %1241 = vmatprep.subr.mxu0 %v1185
        %1242 = vmatpush1.msra.mxu0 %v1184
        %1243 = vmatprep.subr.mxu0 %v1183
        %1244 = vmatpush1.msra.mxu0 %v1182
        %1245 = vmatprep.subr.mxu0 %v1181
        %1246 = vmatpush1.msra.mxu0 %v1180
        %1247 = vmatprep.subr.mxu0 %v1179
        %1248 = vmatpush1.msra.mxu0 %v1178
        %1249 = vmatprep.subr.mxu0 %v1177
        %1250 = vmatpush1.msra.mxu0 %v1176
        %1251 = vmatprep.subr.mxu0 %v1175
        %1252 = vmatpush1.msra.mxu0 %v1174
        %1253 = vmatprep.subr.mxu0 %v1173
        %1254 = vmatpush1.msra.mxu0 %v1172
        %1255 = vmatprep.subr.mxu0 %v1171
        %1256 = vmatpush1.msra.mxu0 %v1170
        %1257 = vmatprep.subr.mxu0 0.0
        %1258 = vmatpush2.msra.mxu0 0.0
        %1259 = vmatprep.subr.mxu0 0.0
        %1260 = vmatpush2.msra.mxu0 0.0
        %1261 = vmatprep.subr.mxu0 0.0
        %1262 = vmatpush2.msra.mxu0 0.0
        %1263 = vmatprep.subr.mxu0 0.0
        %1264 = vmatpush2.msra.mxu0 0.0
        %1265 = vmatprep.subr.mxu0 0.0
        %1266 = vmatpush2.msra.mxu0 0.0
        %1267 = vmatprep.subr.mxu0 0.0
        %1268 = vmatpush2.msra.mxu0 0.0
        %1269 = vmatprep.subr.mxu0 0.0
        %1270 = vmatpush2.msra.mxu0 0.0
        %1271 = vmatprep.subr.mxu0 0.0
        %1272 = vmatpush2.msra.mxu0 0.0
        %1273 = vmatprep.subr.mxu0 0.0
        %1274 = vmatpush2.msra.mxu0 0.0
        %1275 = vmatprep.subr.mxu0 0.0
        %1276 = vmatpush2.msra.mxu0 0.0
        %1277 = vmatprep.subr.mxu0 0.0
        %1278 = vmatpush2.msra.mxu0 0.0
        %1279 = vmatprep.subr.mxu0 0.0
        %1280 = vmatpush2.msra.mxu0 0.0
        %1281 = vmatprep.subr.mxu0 0.0
        %1282 = vmatpush2.msra.mxu0 0.0
        %1283 = vmatprep.subr.mxu0 0.0
        %1284 = vmatpush2.msra.mxu0 0.0
        %1285 = vmatprep.subr.mxu0 0.0
        %1286 = vmatpush2.msra.mxu0 0.0
        %1287 = vmatprep.subr.mxu0 0.0
        %1288 = vmatpush2.msra.mxu0 0.0
        %1289 = vmatprep.mubr.f32.mxu0 0.0
        %1290 = vmatmul.mubr.f32.gmra.mxu0 %v1214
        %v1291 = vpop.f32.mrf.mxu0
        %v1292 = vadd.f32 %v1195, %v1291
        %v1293 = vpop.f32.mrf.mxu0
        %v1294 = vadd.f32 %v1195, %v1293
        %1295 = vmatprep.mubr.f32.mxu0 0.0
        %1296 = vmatmul.mubr.f32.gmra.mxu0 %v1217
        %v1297 = vpop.f32.mrf.mxu0
        %v1298 = vadd.f32 %v1200, %v1297
        %v1299 = vpop.f32.mrf.mxu0
        %v1300 = vadd.f32 %v1200, %v1299
        %1301 = vmatprep.mubr.f32.mxu0 0.0
        %1302 = vmatmul.mubr.f32.gmra.mxu0 %v1220
        %v1303 = vpop.f32.mrf.mxu0
        %v1304 = vadd.f32 %v1205, %v1303
        %v1305 = vpop.f32.mrf.mxu0
        %v1306 = vadd.f32 %v1205, %v1305
        %1307 = vmatprep.mubr.f32.mxu0 0.0
        %1308 = vmatmul.mubr.f32.gmra.mxu0 %v1223
        %v1309 = vpop.f32.mrf.mxu0
        %v1310 = vadd.f32 %v1210, %v1309
        %v1311 = vpop.f32.mrf.mxu0
        %v1312 = vadd.f32 %v1210, %v1311
        %1313 = vdwg.mxu0
        %v1314 = vld [vmem:[%s9] sm:$0xff]
        %v1315 = vld [vmem:[%s9 + $0x8] sm:$0xff]
        %v1316 = vld [vmem:[%s9 + $0x10] sm:$0xff]
        %vm1317 = vcmask 64512
        %v1319 = vsel %vm1317, %v1314, 0
        %v1322 = vsel %vm1317, %v1315, 0
        %v1325 = vsel %vm1317, %v1316, 0
        %1327 = vmatprep.subr.mxu0 0.0
        %1328 = vmatpush1.msra.mxu0 0.0
        %1329 = vmatprep.subr.mxu0 0.0
        %1330 = vmatpush1.msra.mxu0 0.0
        %1331 = vmatprep.subr.mxu0 0.0
        %1332 = vmatpush1.msra.mxu0 0.0
        %1333 = vmatprep.subr.mxu0 0.0
        %1334 = vmatpush1.msra.mxu0 0.0
        %1335 = vmatprep.subr.mxu0 0.0
        %1336 = vmatpush1.msra.mxu0 0.0
        %1337 = vmatprep.subr.mxu0 0.0
        %1338 = vmatpush1.msra.mxu0 0.0
        %1339 = vmatprep.subr.mxu0 0.0
        %1340 = vmatpush1.msra.mxu0 0.0
        %1341 = vmatprep.subr.mxu0 0.0
        %1342 = vmatpush1.msra.mxu0 0.0
        %1343 = vmatprep.subr.mxu0 0.0
        %1344 = vmatpush1.msra.mxu0 0.0
        %1345 = vmatprep.subr.mxu0 0.0
        %1346 = vmatpush1.msra.mxu0 0.0
        %1347 = vmatprep.subr.mxu0 0.0
        %1348 = vmatpush1.msra.mxu0 0.0
        %1349 = vmatprep.subr.mxu0 0.0
        %1350 = vmatpush1.msra.mxu0 0.0
        %1351 = vmatprep.subr.mxu0 0.0
        %1352 = vmatpush1.msra.mxu0 0.0
        %1353 = vmatprep.subr.mxu0 0.0
        %1354 = vmatpush1.msra.mxu0 0.0
        %1355 = vmatprep.subr.mxu0 0.0
        %1356 = vmatpush1.msra.mxu0 0.0
        %1357 = vmatprep.subr.mxu0 %v969
        %1358 = vmatpush1.msra.mxu0 %v967
        %1359 = vmatprep.subr.mxu0 0.0
        %1360 = vmatpush2.msra.mxu0 0.0
        %1361 = vmatprep.subr.mxu0 0.0
        %1362 = vmatpush2.msra.mxu0 0.0
        %1363 = vmatprep.subr.mxu0 0.0
        %1364 = vmatpush2.msra.mxu0 0.0
        %1365 = vmatprep.subr.mxu0 0.0
        %1366 = vmatpush2.msra.mxu0 0.0
        %1367 = vmatprep.subr.mxu0 0.0
        %1368 = vmatpush2.msra.mxu0 0.0
        %1369 = vmatprep.subr.mxu0 0.0
        %1370 = vmatpush2.msra.mxu0 0.0
        %1371 = vmatprep.subr.mxu0 0.0
        %1372 = vmatpush2.msra.mxu0 0.0
        %1373 = vmatprep.subr.mxu0 0.0
        %1374 = vmatpush2.msra.mxu0 0.0
        %1375 = vmatprep.subr.mxu0 0.0
        %1376 = vmatpush2.msra.mxu0 0.0
        %1377 = vmatprep.subr.mxu0 0.0
        %1378 = vmatpush2.msra.mxu0 0.0
        %1379 = vmatprep.subr.mxu0 0.0
        %1380 = vmatpush2.msra.mxu0 0.0
        %1381 = vmatprep.subr.mxu0 0.0
        %1382 = vmatpush2.msra.mxu0 0.0
        %1383 = vmatprep.subr.mxu0 0.0
        %1384 = vmatpush2.msra.mxu0 0.0
        %1385 = vmatprep.subr.mxu0 0.0
        %1386 = vmatpush2.msra.mxu0 0.0
        %1387 = vmatprep.subr.mxu0 0.0
        %1388 = vmatpush2.msra.mxu0 0.0
        %1389 = vmatprep.subr.mxu0 0.0
        %1390 = vmatpush2.msra.mxu0 0.0
        %1391 = vmatprep.mubr.f32.mxu0 0.0
        %1392 = vmatmul.mubr.f32.gmra.mxu0 %v1319
        %v1393 = vpop.f32.mrf.mxu0
        %v1394 = vadd.f32 0.0, %v1393
        %v1395 = vpop.f32.mrf.mxu0
        %v1396 = vadd.f32 0.0, %v1395
        %1397 = vmatprep.mubr.f32.mxu0 0.0
        %1398 = vmatmul.mubr.f32.gmra.mxu0 %v1322
        %v1399 = vpop.f32.mrf.mxu0
        %v1400 = vadd.f32 0.0, %v1399
        %v1401 = vpop.f32.mrf.mxu0
        %v1402 = vadd.f32 0.0, %v1401
        %1403 = vmatprep.mubr.f32.mxu0 0.0
        %1404 = vmatmul.mubr.f32.gmra.mxu0 %v1325
        %v1405 = vpop.f32.mrf.mxu0
        %v1406 = vadd.f32 0.0, %v1405
        %v1407 = vpop.f32.mrf.mxu0
        %v1408 = vadd.f32 0.0, %v1407
        %1409 = vdwg.mxu0
        %v1410 = vadd.f32 %v1292, %v1294
        %1411 = vadd.xlane.f32.xlu0 %v1410
        %v1412 = vpop.xlane.xlu0 %1411
        %v1413 = vadd.f32 %v1298, %v1300
        %1414 = vadd.xlane.f32.xlu0 %v1413
        %v1415 = vpop.xlane.xlu0 %1414
        %v1416 = vadd.f32 %v1304, %v1306
        %1417 = vadd.xlane.f32.xlu0 %v1416
        %v1418 = vpop.xlane.xlu0 %1417
        %v1419 = vadd.f32 %v1310, %v1312
        %1420 = vadd.xlane.f32.xlu0 %v1419
        %v1421 = vpop.xlane.xlu0 %1420
        %v1422 = vrcp.pop 256.0
        %v1423 = vmul.f32 %v1412, %v1422
        %v1424 = vmul.f32 %v1415, %v1422
        %v1425 = vmul.f32 %v1418, %v1422
        %v1426 = vmul.f32 %v1421, %v1422
        %v1427 = vadd.f32 %v1394, %v1396
        %1428 = vadd.xlane.f32.xlu0 %v1427
        %v1429 = vpop.xlane.xlu0 %1428
        %v1430 = vadd.f32 %v1400, %v1402
        %1431 = vadd.xlane.f32.xlu0 %v1430
        %v1432 = vpop.xlane.xlu0 %1431
        %v1433 = vadd.f32 %v1406, %v1408
        %1434 = vadd.xlane.f32.xlu0 %v1433
        %v1435 = vpop.xlane.xlu0 %1434
        %v1436 = vmul.f32 %v1429, %v1422
        %v1437 = vmul.f32 %v1432, %v1422
        %v1438 = vmul.f32 %v1435, %v1422
        %v1439 = vadd.f32 %v967, %v969
        %1440 = vadd.xlane.f32.xlu0 %v1439
        %v1441 = vpop.xlane.xlu0 %1440
        %v1442 = vmul.f32 %v1441, %v1422
        %v1443 = vsel %vm469, %v1423, -inf
        %v1444 = vsel %vm469, %v1424, -inf
        %v1445 = vsel %vm469, %v1425, -inf
        %v1446 = vsel %vm469, %v1426, -inf
        %v1447 = vsel %vm469, %v1436, -inf
        %v1448 = vmax.f32 %v1443, %v1447
        %v1449 = vsel %vm469, %v1437, -inf
        %v1450 = vmax.f32 %v1444, %v1449
        %v1451 = vsel %vm469, %v1438, -inf
        %v1452 = vmax.f32 %v1445, %v1451
        %v1453 = vsel %vm469, %v1442, -inf
        %v1454 = vmax.f32 %v1446, %v1453
        %v1455 = vmax.f32 %v1448, %v1450
        %v1456 = vmax.f32 %v1452, %v1454
        %v1457 = vmax.f32 %v1455, %v1456
        %v1458 = vrot.slane %v1457, 4
        %v1459 = vmax.f32 %v1457, %v1458
        %v1460 = vrot.slane %v1459, 2
        %v1461 = vmax.f32 %v1459, %v1460
        %v1462 = vrot.slane %v1461, 1
        %v1463 = vmax.f32 %v1461, %v1462
        %v1464 = vsub.f32 %v1423, %v1463
        %v1465 = vsub.f32 %v1424, %v1463
        %v1466 = vsub.f32 %v1425, %v1463
        %v1467 = vsub.f32 %v1426, %v1463
        %v1468 = vsub.f32 %v1436, %v1463
        %v1469 = vsub.f32 %v1437, %v1463
        %v1470 = vsub.f32 %v1438, %v1463
        %v1471 = vsub.f32 %v1442, %v1463
        %v1472 = vmul.f32 %v1464, 1.442695
        %v1473 = vpow.pop %v1472
        %v1474 = vmul.f32 %v1465, 1.442695
        %v1475 = vpow.pop %v1474
        %v1476 = vmul.f32 %v1466, 1.442695
        %v1477 = vpow.pop %v1476
        %v1478 = vmul.f32 %v1467, 1.442695
        %v1479 = vpow.pop %v1478
        %v1480 = vmul.f32 %v1468, 1.442695
        %v1481 = vpow.pop %v1480
        %v1482 = vmul.f32 %v1469, 1.442695
        %v1483 = vpow.pop %v1482
        %v1484 = vmul.f32 %v1470, 1.442695
        %v1485 = vpow.pop %v1484
        %v1486 = vmul.f32 %v1471, 1.442695
        %v1487 = vpow.pop %v1486
        %v1488 = vsel %vm469, %v1473, 0.0
        %v1489 = vsel %vm469, %v1475, 0.0
        %v1490 = vadd.f32 %v1488, %v1489
        %v1491 = vsel %vm469, %v1477, 0.0
        %v1492 = vadd.f32 %v1490, %v1491
        %v1493 = vsel %vm469, %v1479, 0.0
        %v1494 = vadd.f32 %v1492, %v1493
        %v1495 = vsel %vm469, %v1481, 0.0
        %v1496 = vadd.f32 %v1494, %v1495
        %v1497 = vsel %vm469, %v1483, 0.0
        %v1498 = vadd.f32 %v1496, %v1497
        %v1499 = vsel %vm469, %v1485, 0.0
        %v1500 = vadd.f32 %v1498, %v1499
        %v1501 = vsel %vm469, %v1487, 0.0
        %v1502 = vadd.f32 %v1500, %v1501
        %v1503 = vrot.slane %v1502, 4
        %v1504 = vadd.f32 %v1502, %v1503
        %v1505 = vrot.slane %v1504, 2
        %v1506 = vadd.f32 %v1504, %v1505
        %v1507 = vrot.slane %v1506, 1
        %v1508 = vadd.f32 %v1506, %v1507
        %v1509 = vrcp.pop %v1508
        %v1510 = vmul.f32 %v1473, %v1509
        %v1511 = vmul.f32 %v1475, %v1509
        %v1512 = vmul.f32 %v1477, %v1509
        %v1513 = vmul.f32 %v1479, %v1509
        %v1514 = vmul.f32 %v1481, %v1509
        %v1515 = vmul.f32 %v1483, %v1509
        %v1516 = vmul.f32 %v1485, %v1509
        %v1517 = vmul.f32 %v1487, %v1509
        %1519 = vset.pattern.permute.xlu0 0
        %1520 = vperm.xlu0 %1519, %v1510
        %v1521 = vpop.permute.xlu0 %1520
        %1524 = vset.pattern.permute.xlu0 0
        %1525 = vperm.xlu0 %1524, %v1511
        %v1526 = vpop.permute.xlu0 %1525
        %1529 = vset.pattern.permute.xlu0 0
        %1530 = vperm.xlu0 %1529, %v1512
        %v1531 = vpop.permute.xlu0 %1530
        %v1533 = vmul.f32 %v1292, %v1521
        %v1534 = vmul.f32 %v1294, %v1521
        %v1535 = vmul.f32 %v1298, %v1526
        %v1536 = vmul.f32 %v1300, %v1526
        %v1537 = vmul.f32 %v1304, %v1531
        %v1538 = vmul.f32 %v1306, %v1531
        %1540 = vset.pattern.permute.xlu0 0
        %1541 = vperm.xlu0 %1540, %v1514
        %v1542 = vpop.permute.xlu0 %1541
        %1545 = vset.pattern.permute.xlu0 0
        %1546 = vperm.xlu0 %1545, %v1515
        %v1547 = vpop.permute.xlu0 %1546
        %1550 = vset.pattern.permute.xlu0 0
        %1551 = vperm.xlu0 %1550, %v1516
        %v1552 = vpop.permute.xlu0 %1551
        %v1554 = vmul.f32 %v1394, %v1542
        %v1555 = vmul.f32 %v1396, %v1542
        %v1556 = vmul.f32 %v1400, %v1547
        %v1557 = vmul.f32 %v1402, %v1547
        %v1558 = vmul.f32 %v1406, %v1552
        %v1559 = vmul.f32 %v1408, %v1552
        %v1560 = vadd.f32 %v1533, %v1554
        %v1561 = vadd.f32 %v1534, %v1555
        %v1562 = vadd.f32 %v1535, %v1556
        %v1563 = vadd.f32 %v1536, %v1557
        %v1564 = vadd.f32 %v1537, %v1558
        %v1565 = vadd.f32 %v1538, %v1559
        %1566 = vst [vmem:[%s419] sm:$0xff] %v1560
        %1567 = vst [vmem:[%s419 + $0x8] sm:$0xff] %v1561
        %1568 = vst [vmem:[%s419 + $0x10] sm:$0xff] %v1562
        %1569 = vst [vmem:[%s419 + $0x18] sm:$0xff] %v1563
        %1570 = vst [vmem:[%s419 + $0x20] sm:$0xff] %v1564
        %1571 = vst [vmem:[%s419 + $0x28] sm:$0xff] %v1565
        %1573 = vset.pattern.permute.xlu0 0
        %1574 = vperm.xlu0 %1573, %v1513
        %v1575 = vpop.permute.xlu0 %1574
        %v1577 = vmul.f32 %v1310, %v1575
        %v1578 = vmul.f32 %v1312, %v1575
        %1580 = vset.pattern.permute.xlu0 0
        %1581 = vperm.xlu0 %1580, %v1517
        %v1582 = vpop.permute.xlu0 %1581
        %v1584 = vmul.f32 %v967, %v1582
        %v1585 = vmul.f32 %v969, %v1582
        %v1586 = vadd.f32 %v1577, %v1584
        %v1587 = vadd.f32 %v1578, %v1585
        %1588 = vst [vmem:[%s419 + $0x30] sm:$0xff] %v1586
        %1589 = vst [vmem:[%s419 + $0x38] sm:$0xff] %v1587
        %s1590 = sand.u32 %s271, 1
        %s1591 = scalar_lea.sflag [#allocation5], %s1590
        %s1592 = sand.u32 %s271, 1
        %s1593 = smul.addr %s1592, 64
        %s1594 = scalar_lea.vmem [#allocation9], %s1593
        // Predicated region
        $region77: #{tpu_custom_call.1} parent=63 // pred_check
          %p1595 = pneg %p281
        $region78: #{tpu_custom_call.1} parent=63 // pred_check_branch
          %1597 = sbr.rel (%p1595) target = $region80
        $region79: #{tpu_custom_call.1} parent=63 // pred_region
          %s1599 = ssub.s32 1024, 1024
          %1600 = vsyncadd %s1591, %s1599
          %s1601 = smul.addr %s27, 8
          %s1602 = smul.addr %s1601, 128
          %s1603 = scalar_lea.hbm %s11, %s1602
          %s1604 = sshll.u32 %s1594, 4
          %s1605 = int_to_ptr.vmem [resolvable:$true] %s1604
          %1610 = dma.vmem_to_hbm [thread:$0]  %s1605, 1024, %s1603, %s1591, 256, 256, 16
        $region80: #{tpu_custom_call.1} parent=63 // pred_fallthru
          _
      $region64: #{tpu_custom_call.1} parent=5 // pred_fallthru
        _
      %p1611 = scmp.le.s32.totalorder 2, %s22
      // Predicated region
      $region81: #{tpu_custom_call.1} parent=5 // pred_check
        %p1612 = pneg %p1611
      $region82: #{tpu_custom_call.1} parent=5 // pred_check_branch
        %1614 = sbr.rel (%p1612) target = $region84
      $region83: #{tpu_custom_call.1} parent=5 // pred_region
        %s1615 = ssub.s32 %s22, 2
        // Predicated region
        $region85: #{tpu_custom_call.1} parent=83 // pred_check
          %p1616 = pneg %p287
        $region86: #{tpu_custom_call.1} parent=83 // pred_check_branch
          %1618 = sbr.rel (%p1616) target = $region88
        $region87: #{tpu_custom_call.1} parent=83 // pred_region
          %s1619 = sand.u32 %s272, 1
          %s1620 = scalar_lea.sflag [#allocation5], %s1619
          %s1621 = sand.u32 %s272, 1
          %s1622 = smul.addr %s1621, 64
          %s1623 = scalar_lea.vmem [#allocation9], %s1622
          %1624 = dma.done %s1620, 1024
        $region88: #{tpu_custom_call.1} parent=83 // pred_fallthru
          _
      $region84: #{tpu_custom_call.1} parent=5 // pred_fallthru
        _
    $region6: #{tpu_custom_call.1} parent=1 // loop_footer
      %s26 = sadd.s32 1, %s22
    $region7: #{tpu_custom_call.1} parent=1 // loop_footer_branch
      %21 = sbr.rel target = $region3
    $region8: #{tpu_custom_call.1} parent=1 // loop_exit
      _
    %1625 = vsyncpa [#allocation4], 1
    %s1626 = scalar_lea.sflag [#allocation4], 1
    %1627 = vsyncpa %s1626, 1
    %1628 = vsyncpa [#allocation7], 1
    %1629 = vsyncpa [#allocation5], 1
    %s1630 = scalar_lea.sflag [#allocation5], 1
    %1631 = vsyncpa %s1630, 1

</llo_original>
